<compile_context>
chip_gen: v5e
topology: v5e:2x2
jax: 0.10.0
libtpu: 0.0.40
codegen_flags: <defaults>
</compile_context>

<pallas_src>
import functools

import numpy as np

import jax
import jax.numpy as jnp
from jax.experimental import pallas as pl
from jax.experimental.pallas import tpu as pltpu

LANE = 128          # vreg lane width; channel axis is zero-padded to this
KSIZE = 3           # every conv / deconv block in this model uses kernel_size=3
_BN_EPS = 1e-5      # nn.BatchNorm1d default


# ----------------------------- Pallas kernel --------------------------------

def _fused_ae_kernel(x_ref, w_ref, g_ref, b_ref, m_ref, o_ref, *, layer_plan, eps):
    """Entire AutoEncoder forward pass in one kernel.

      x_ref : (R, 128)            input canvas (channels on lanes, zero halos)
      w_ref : (n, K*128, 128)     bf16 stacked per-tap weights, one slab per layer
      g_ref : (n, 1, 128)         BN gamma  (padded lanes = 0)
      b_ref : (n, 1, 128)         BN beta   (padded lanes = 0)
      m_ref : (n, R, 1)           0/1 valid-output-row masks per layer
      o_ref : (R, 128)            output canvas
      layer_plan : static tuple of (roll_shifts, 1/(B*L_out)) per layer
    """
    a = x_ref[...]                                           # (R, 128) f32 canvas

    for l, (shifts, inv_n) in enumerate(layer_plan):         # static unroll (4)
        # ---- tap selection: constant sublane rolls of the zero-padded canvas.
        # Stride / zero-insertion / boundary padding are all encoded in which
        # canvas rows hold data (the rest are exact zeros), so a roll per tap is
        # enough; the XLU does this while the MXU is busy with the matmul.
        pieces = [a if s == 0 else pltpu.roll(a, s, axis=0) for s in shifts]

        # ---- single fused MXU contraction over (taps x channels):
        #      bf16 operands, f32 accumulation.
        taps = jnp.concatenate(pieces, axis=1).astype(jnp.bfloat16)   # (R, K*128)
        z = jnp.dot(taps, w_ref[l], preferred_element_type=jnp.float32)  # (R,128)

        # ---- BatchNorm1d (training mode, biased variance) + ReLU, f32 epilogue.
        # Rows that are not real output positions hold garbage -> mask them out
        # of the statistics and of the activation (the zeros are exactly the
        # padding / zero-insertion the next layer's taps rely on).
        mask = m_ref[l]                                       # (R, 1) 0/1 f32
        zm = z * mask
        s1 = jnp.sum(zm, axis=0, keepdims=True)
        s2 = jnp.sum(zm * zm, axis=0, keepdims=True)
        mean = s1 * inv_n
        var = jnp.maximum(s2 * inv_n - mean * mean, 0.0)
        scale = g_ref[l] * jax.lax.rsqrt(var + eps)           # gamma / sqrt(var+eps)
        shift = b_ref[l] - mean * scale
        a = jnp.maximum(z * scale + shift, 0.0) * mask        # BN + ReLU + re-zero

    o_ref[...] = a.astype(o_ref.dtype)


# ------------------------- host-side parameter packing ----------------------

def build_model(enc_cfgs, dec_cfgs, *, B, L_in, C_in):
    """Pack PyTorch-layout parameters into kernel constants + static plan.

    Every layer's signal is placed on a shared per-batch coordinate grid
    [0, L_in) (layer l uses spacing d_l); zero halo rows absorb conv padding,
    transposed-conv output_padding and out-of-range taps.  With that layout the
    tap reads of every layer are *constant* row offsets (rolls).
    """
    layers, d, l_cur = [], 1, L_in
    for p in enc_cfgs:                                   # Conv1d -> BN -> ReLU
        w = np.asarray(p["w"], np.float32)               # (C_out, C_in, K)
        c_out, c_in, k = w.shape
        assert k == KSIZE
        s, pad = p["stride"], p["padding"]
        l_out = (l_cur + 2 * pad - k) // s + 1
        layers.append(dict(offs=[d * (t - pad) for t in range(k)],
                           wt=np.transpose(w, (2, 1, 0)),            # (K,Cin,Cout)
                           c_in=c_in, c_out=c_out, gamma=p["gamma"], beta=p["beta"],
                           d_out=d * s, l_out=l_out))
        d, l_cur = d * s, l_out
    for p in dec_cfgs:                                   # (ReLU->) ConvT1d -> BN -> ReLU
        w = np.asarray(p["w"], np.float32)               # (C_in, C_out, K)
        c_in, c_out, k = w.shape
        assert k == KSIZE
        s, pad, op = p["stride"], p["padding"], p["output_padding"]
        assert d % s == 0, "deconv stride must divide the current grid spacing"
        d_out = d // s
        l_out = (l_cur - 1) * s - 2 * pad + k + op
        layers.append(dict(offs=[d_out * (pad - t) for t in range(k)],
                           wt=np.transpose(w, (2, 0, 1)),            # (K,Cin,Cout)
                           c_in=c_in, c_out=c_out, gamma=p["gamma"], beta=p["beta"],
                           d_out=d_out, l_out=l_out))
        d, l_cur = d_out, l_out

    # Canvas geometry (zero halos sized so every valid tap read stays in-batch).
    h_left = max(0, max(-min(l["offs"]) for l in layers))
    reach = max(l["d_out"] * (l["l_out"] - 1) + max(max(l["offs"]), 0) for l in layers)
    h_right = max(0, reach - (L_in - 1))
    g_seg = h_left + L_in + h_right
    while (B * g_seg) % 8:                               # keep sublane-tile aligned
        g_seg += 1
    rows = B * g_seg
    assert layers[-1]["d_out"] == 1                      # final layer lands densely

    n = len(layers)
    W = np.zeros((n, KSIZE * LANE, LANE), np.float32)
    G = np.zeros((n, 1, LANE), np.float32)               # padded lanes stay 0
    Be = np.zeros((n, 1, LANE), np.float32)
    M = np.zeros((n, rows, 1), np.float32)
    plan_layers = []
    for i, l in enumerate(layers):
        for t in range(KSIZE):
            W[i, t * LANE:t * LANE + l["c_in"], :l["c_out"]] = l["wt"][t]
        G[i, 0, :l["c_out"]] = np.asarray(l["gamma"], np.float32)
        Be[i, 0, :l["c_out"]] = np.asarray(l["beta"], np.float32)
        for b in range(B):
            for j in range(l["l_out"]):
                M[i, b * g_seg + h_left + l["d_out"] * j, 0] = 1.0
        shifts = tuple(int((-off) % rows) for off in l["offs"])   # roll[r] = a[r+off]
        plan_layers.append((shifts, 1.0 / float(B * l["l_out"])))

    params = dict(w=jnp.asarray(W, jnp.bfloat16),
                  gamma=jnp.asarray(G), beta=jnp.asarray(Be), mask=jnp.asarray(M))
    plan = dict(layers=tuple(plan_layers), rows=rows, g_seg=g_seg, h=h_left,
                B=B, C_in=C_in, L_in=L_in,
                C_out=layers[-1]["c_out"], L_out=layers[-1]["l_out"])
    return params, plan


# ------------------------------ forward wrapper ------------------------------

def _full_spec(shape):
    if len(shape) == 2:
        return pl.BlockSpec(shape, lambda i: (0, 0))
    return pl.BlockSpec(shape, lambda i: (0, 0, 0))


def make_forward(params, plan, *, eps=_BN_EPS):
    rows, g_seg, h = plan["rows"], plan["g_seg"], plan["h"]
    B, C_in, L_in = plan["B"], plan["C_in"], plan["L_in"]
    C_out, L_out = plan["C_out"], plan["L_out"]

    call = pl.pallas_call(
        functools.partial(_fused_ae_kernel, layer_plan=plan["layers"], eps=eps),
        out_shape=jax.ShapeDtypeStruct((rows, LANE), jnp.float32),
        grid=(1,),
        in_specs=[_full_spec((rows, LANE)),
                  _full_spec(params["w"].shape),
                  _full_spec(params["gamma"].shape),
                  _full_spec(params["beta"].shape),
                  _full_spec(params["mask"].shape)],
        out_specs=_full_spec((rows, LANE)),
    )

    @jax.jit
    def forward(x, w, gamma, beta, mask):
        # NCL -> canvas (channels on lanes, zero halo rows); single jit so XLA
        # fuses this glue with the pallas_call's surroundings.
        xt = jnp.transpose(x, (0, 2, 1))                               # (B, L, C)
        xt = jnp.pad(xt, ((0, 0), (h, g_seg - h - L_in), (0, LANE - C_in)))
        a0 = xt.reshape(B * g_seg, LANE)
        out = call(a0, w, gamma, beta, mask)                           # (rows, 128)
        y = out.reshape(B, g_seg, LANE)[:, h:h + L_out, :C_out]
        return jnp.transpose(y, (0, 2, 1))                             # (B, C, L)

    return lambda x: forward(x, params["w"], params["gamma"],
                             params["beta"], params["mask"])


# ------------------------------ pure-JAX reference ---------------------------

def _reference_forward(x, enc_params, dec_params, eps=_BN_EPS):
    """PyTorch-semantics reference (training-mode BN, conv bias included)."""
    def bn_relu(z, gamma, beta):
        mean = jnp.mean(z, axis=(0, 2), keepdims=True)
        var = jnp.mean((z - mean) ** 2, axis=(0, 2), keepdims=True)
        zn = (z - mean) * jax.lax.rsqrt(var + eps)
        return jnp.maximum(zn * gamma[None, :, None] + beta[None, :, None], 0.0)

    h = x
    for p in enc_params:
        z = jax.lax.conv_general_dilated(
            h, p["w"], window_strides=(p["stride"],),
            padding=[(p["padding"], p["padding"])],
            dimension_numbers=("NCH", "OIH", "NCH"),
            precision=jax.lax.Precision.HIGHEST)
        z = z + p["b"][None, :, None]
        h = bn_relu(z, p["gamma"], p["beta"])
    for p in dec_params:
        h = jnp.maximum(h, 0.0)                            # leading ReLU (no-op here)
        k = p["w"].shape[2]
        w_eff = jnp.flip(p["w"], axis=2).transpose(1, 0, 2)  # -> (C_out, C_in, K)
        z = jax.lax.conv_general_dilated(
            h, w_eff, window_strides=(1,),
            padding=[(k - 1 - p["padding"],
                      k - 1 - p["padding"] + p["output_padding"])],
            lhs_dilation=(p["stride"],),
            dimension_numbers=("NCH", "OIH", "NCH"),
            precision=jax.lax.Precision.HIGHEST)
        z = z + p["b"][None, :, None]
        h = bn_relu(z, p["gamma"], p["beta"])
    return h


# ------------------------------------ main -----------------------------------

if __name__ == "__main__":
    key = jax.random.PRNGKey(0)
    ks = jax.random.split(key, 20)

    B, C, L = 2, 4, 16
    x = jax.random.normal(ks[0], (B, C, L), dtype=jnp.float32)

    # config['encoder']: two Conv1d blocks, channels 4->8->16, length 16->8->4.
    # Conv biases `b` exist in the PyTorch module; the kernel drops them because
    # training-mode BatchNorm cancels per-channel constants — the reference keeps
    # them and verifies that claim numerically.
    enc_params = [
        dict(w=0.2 * jax.random.normal(ks[1], (8, 4, 3), jnp.float32),
             b=0.1 * jax.random.normal(ks[2], (8,), jnp.float32),
             gamma=1.0 + 0.1 * jax.random.normal(ks[3], (8,), jnp.float32),
             beta=0.1 * jax.random.normal(ks[4], (8,), jnp.float32),
             stride=2, padding=1),
        dict(w=0.2 * jax.random.normal(ks[5], (16, 8, 3), jnp.float32),
             b=0.1 * jax.random.normal(ks[6], (16,), jnp.float32),
             gamma=1.0 + 0.1 * jax.random.normal(ks[7], (16,), jnp.float32),
             beta=0.1 * jax.random.normal(ks[8], (16,), jnp.float32),
             stride=2, padding=1),
    ]
    # config['decoder']: two ConvTranspose1d blocks, channels 16->8->4, length 4->8->16.
    dec_params = [
        dict(w=0.2 * jax.random.normal(ks[9], (16, 8, 3), jnp.float32),    # (C_in, C_out, K)
             b=0.1 * jax.random.normal(ks[10], (8,), jnp.float32),
             gamma=1.0 + 0.1 * jax.random.normal(ks[11], (8,), jnp.float32),
             beta=0.1 * jax.random.normal(ks[12], (8,), jnp.float32),
             stride=2, padding=1, output_padding=1),
        dict(w=0.2 * jax.random.normal(ks[13], (8, 4, 3), jnp.float32),
             b=0.1 * jax.random.normal(ks[14], (4,), jnp.float32),
             gamma=1.0 + 0.1 * jax.random.normal(ks[15], (4,), jnp.float32),
             beta=0.1 * jax.random.normal(ks[16], (4,), jnp.float32),
             stride=2, padding=1, output_padding=1),
    ]

    params, plan = build_model(enc_params, dec_params, B=B, L_in=L, C_in=C)
    fwd = make_forward(params, plan)

    # TODO(synk): BatchNorm running-stat updates (training-time side effect) are
    # not part of the forward output and are not modeled.
    x_hat = jax.block_until_ready(fwd(x))
    assert x_hat.shape == (B, C, L), x_hat.shape
    assert bool(jnp.all(jnp.isfinite(x_hat)))

    ref = _reference_forward(x, enc_params, dec_params)
    err = float(jnp.max(jnp.abs(x_hat - ref)))
    # 5e-2: bf16 MXU operands (per the perf review) vs. the f32 HIGHEST reference.
    assert err < 5e-2, f"kernel/reference mismatch: max abs err = {err}"
    print("KERNEL_OK")
</pallas_src>

<mosaic_0001>
module attributes {stable_mosaic.version = 11 : i64} {
  func.func @_fused_ae_kernel(%arg0: i32, %arg1: memref<40x128xf32, #tpu.memory_space<vmem>>, %arg2: memref<4x384x128xbf16, #tpu.memory_space<vmem>>, %arg3: memref<4x1x128xf32, #tpu.memory_space<vmem>>, %arg4: memref<4x1x128xf32, #tpu.memory_space<vmem>>, %arg5: memref<4x40x1xf32, #tpu.memory_space<vmem>>, %arg6: memref<40x128xf32, #tpu.memory_space<vmem>>) attributes {dimension_semantics = [#tpu.dimension_semantics<arbitrary>], iteration_bounds = array<i64: 1>, scalar_prefetch = 0 : i64, scratch_operands = 0 : i64, tpu.core_type = #tpu.core_type<tc>, window_params = [{pipeline_mode = #tpu.pipeline_mode<synchronous>, transform_indices = @transform_0, window_bounds = array<i64: 40, 128>}, {pipeline_mode = #tpu.pipeline_mode<synchronous>, transform_indices = @transform_1, window_bounds = array<i64: 4, 384, 128>}, {pipeline_mode = #tpu.pipeline_mode<synchronous>, transform_indices = @transform_2, window_bounds = array<i64: 4, 1, 128>}, {pipeline_mode = #tpu.pipeline_mode<synchronous>, transform_indices = @transform_3, window_bounds = array<i64: 4, 1, 128>}, {pipeline_mode = #tpu.pipeline_mode<synchronous>, transform_indices = @transform_4, window_bounds = array<i64: 4, 40, 1>}, {pipeline_mode = #tpu.pipeline_mode<synchronous>, transform_indices = @transform_5, window_bounds = array<i64: 40, 128>}]} {
    %c0 = arith.constant 0 : index
    %c0_0 = arith.constant 0 : index
    %0 = vector.load %arg1[%c0, %c0_0] : memref<40x128xf32, #tpu.memory_space<vmem>>, vector<40x128xf32>
    %c1_i32 = arith.constant 1 : i32
    %1 = tpu.dynamic_rotate %0 by %c1_i32 dim 0 : vector<40x128xf32>, i32 -> vector<40x128xf32>
    %c39_i32 = arith.constant 39 : i32
    %2 = tpu.dynamic_rotate %0 by %c39_i32 dim 0 : vector<40x128xf32>, i32 -> vector<40x128xf32>
    %3 = tpu.concatenate %1, %0, %2 in 1 : vector<40x128xf32>, vector<40x128xf32>, vector<40x128xf32> -> vector<40x384xf32>
    %4 = arith.truncf %3 : vector<40x384xf32> to vector<40x384xbf16>
    %c0_1 = arith.constant 0 : index
    %c0_2 = arith.constant 0 : index
    %c0_3 = arith.constant 0 : index
    %5 = vector.load %arg2[%c0_1, %c0_2, %c0_3] : memref<4x384x128xbf16, #tpu.memory_space<vmem>>, vector<1x384x128xbf16>
    %6 = vector.shape_cast %5 : vector<1x384x128xbf16> to vector<384x128xbf16>
    %cst = arith.constant dense<0.000000e+00> : vector<40x128xf32>
    %7 = tpu.matmul %4, %6, %cst {dimension_numbers = #tpu.dot_dimension_numbers<[1], [0], [0], [1], [0, 0, 1, 1], [], []>} : vector<40x384xbf16>, vector<384x128xbf16>, vector<40x128xf32> -> vector<40x128xf32>
    %c0_4 = arith.constant 0 : index
    %c0_5 = arith.constant 0 : index
    %c0_6 = arith.constant 0 : index
    %8 = vector.load %arg5[%c0_4, %c0_5, %c0_6] : memref<4x40x1xf32, #tpu.memory_space<vmem>>, vector<1x40x1xf32>
    %9 = vector.shape_cast %8 : vector<1x40x1xf32> to vector<40x1xf32>
    %10 = vector.broadcast %9 : vector<40x1xf32> to vector<40x128xf32>
    %11 = arith.mulf %7, %10 : vector<40x128xf32>
    %cst_7 = arith.constant dense<0.000000e+00> : vector<128xf32>
    %12 = vector.multi_reduction <add>, %11, %cst_7 [0] : vector<40x128xf32> to vector<128xf32>
    %13 = vector.shape_cast %12 : vector<128xf32> to vector<1x128xf32>
    %14 = arith.mulf %11, %11 : vector<40x128xf32>
    %cst_8 = arith.constant dense<0.000000e+00> : vector<128xf32>
    %15 = vector.multi_reduction <add>, %14, %cst_8 [0] : vector<40x128xf32> to vector<128xf32>
    %16 = vector.shape_cast %15 : vector<128xf32> to vector<1x128xf32>
    %cst_9 = arith.constant 6.250000e-02 : f32
    %17 = vector.broadcast %cst_9 : f32 to vector<1x128xf32>
    %18 = arith.mulf %13, %17 : vector<1x128xf32>
    %cst_10 = arith.constant 6.250000e-02 : f32
    %19 = vector.broadcast %cst_10 : f32 to vector<1x128xf32>
    %20 = arith.mulf %16, %19 : vector<1x128xf32>
    %21 = arith.mulf %18, %18 : vector<1x128xf32>
    %22 = arith.subf %20, %21 : vector<1x128xf32>
    %cst_11 = arith.constant 0.000000e+00 : f32
    %23 = vector.broadcast %cst_11 : f32 to vector<1x128xf32>
    %24 = arith.maximumf %22, %23 : vector<1x128xf32>
    %c0_12 = arith.constant 0 : index
    %c0_13 = arith.constant 0 : index
    %c0_14 = arith.constant 0 : index
    %25 = vector.load %arg3[%c0_12, %c0_13, %c0_14] : memref<4x1x128xf32, #tpu.memory_space<vmem>>, vector<1x1x128xf32>
    %26 = vector.shape_cast %25 : vector<1x1x128xf32> to vector<1x128xf32>
    %cst_15 = arith.constant 9.99999974E-6 : f32
    %27 = vector.broadcast %cst_15 : f32 to vector<1x128xf32>
    %28 = arith.addf %24, %27 : vector<1x128xf32>
    %29 = math.rsqrt %28 : vector<1x128xf32>
    %30 = arith.mulf %26, %29 : vector<1x128xf32>
    %c0_16 = arith.constant 0 : index
    %c0_17 = arith.constant 0 : index
    %c0_18 = arith.constant 0 : index
    %31 = vector.load %arg4[%c0_16, %c0_17, %c0_18] : memref<4x1x128xf32, #tpu.memory_space<vmem>>, vector<1x1x128xf32>
    %32 = vector.shape_cast %31 : vector<1x1x128xf32> to vector<1x128xf32>
    %33 = arith.mulf %18, %30 : vector<1x128xf32>
    %34 = arith.subf %32, %33 : vector<1x128xf32>
    %35 = vector.broadcast %30 : vector<1x128xf32> to vector<40x128xf32>
    %36 = arith.mulf %7, %35 : vector<40x128xf32>
    %37 = vector.broadcast %34 : vector<1x128xf32> to vector<40x128xf32>
    %38 = arith.addf %36, %37 : vector<40x128xf32>
    %cst_19 = arith.constant 0.000000e+00 : f32
    %39 = vector.broadcast %cst_19 : f32 to vector<40x128xf32>
    %40 = arith.maximumf %38, %39 : vector<40x128xf32>
    %41 = vector.broadcast %9 : vector<40x1xf32> to vector<40x128xf32>
    %42 = arith.mulf %40, %41 : vector<40x128xf32>
    %c2_i32 = arith.constant 2 : i32
    %43 = tpu.dynamic_rotate %42 by %c2_i32 dim 0 : vector<40x128xf32>, i32 -> vector<40x128xf32>
    %c38_i32 = arith.constant 38 : i32
    %44 = tpu.dynamic_rotate %42 by %c38_i32 dim 0 : vector<40x128xf32>, i32 -> vector<40x128xf32>
    %45 = tpu.concatenate %43, %42, %44 in 1 : vector<40x128xf32>, vector<40x128xf32>, vector<40x128xf32> -> vector<40x384xf32>
    %46 = arith.truncf %45 : vector<40x384xf32> to vector<40x384xbf16>
    %c1 = arith.constant 1 : index
    %c0_20 = arith.constant 0 : index
    %c0_21 = arith.constant 0 : index
    %47 = vector.load %arg2[%c1, %c0_20, %c0_21] : memref<4x384x128xbf16, #tpu.memory_space<vmem>>, vector<1x384x128xbf16>
    %48 = vector.shape_cast %47 : vector<1x384x128xbf16> to vector<384x128xbf16>
    %cst_22 = arith.constant dense<0.000000e+00> : vector<40x128xf32>
    %49 = tpu.matmul %46, %48, %cst_22 {dimension_numbers = #tpu.dot_dimension_numbers<[1], [0], [0], [1], [0, 0, 1, 1], [], []>} : vector<40x384xbf16>, vector<384x128xbf16>, vector<40x128xf32> -> vector<40x128xf32>
    %c1_23 = arith.constant 1 : index
    %c0_24 = arith.constant 0 : index
    %c0_25 = arith.constant 0 : index
    %50 = vector.load %arg5[%c1_23, %c0_24, %c0_25] : memref<4x40x1xf32, #tpu.memory_space<vmem>>, vector<1x40x1xf32>
    %51 = vector.shape_cast %50 : vector<1x40x1xf32> to vector<40x1xf32>
    %52 = vector.broadcast %51 : vector<40x1xf32> to vector<40x128xf32>
    %53 = arith.mulf %49, %52 : vector<40x128xf32>
    %cst_26 = arith.constant dense<0.000000e+00> : vector<128xf32>
    %54 = vector.multi_reduction <add>, %53, %cst_26 [0] : vector<40x128xf32> to vector<128xf32>
    %55 = vector.shape_cast %54 : vector<128xf32> to vector<1x128xf32>
    %56 = arith.mulf %53, %53 : vector<40x128xf32>
    %cst_27 = arith.constant dense<0.000000e+00> : vector<128xf32>
    %57 = vector.multi_reduction <add>, %56, %cst_27 [0] : vector<40x128xf32> to vector<128xf32>
    %58 = vector.shape_cast %57 : vector<128xf32> to vector<1x128xf32>
    %cst_28 = arith.constant 1.250000e-01 : f32
    %59 = vector.broadcast %cst_28 : f32 to vector<1x128xf32>
    %60 = arith.mulf %55, %59 : vector<1x128xf32>
    %cst_29 = arith.constant 1.250000e-01 : f32
    %61 = vector.broadcast %cst_29 : f32 to vector<1x128xf32>
    %62 = arith.mulf %58, %61 : vector<1x128xf32>
    %63 = arith.mulf %60, %60 : vector<1x128xf32>
    %64 = arith.subf %62, %63 : vector<1x128xf32>
    %cst_30 = arith.constant 0.000000e+00 : f32
    %65 = vector.broadcast %cst_30 : f32 to vector<1x128xf32>
    %66 = arith.maximumf %64, %65 : vector<1x128xf32>
    %c1_31 = arith.constant 1 : index
    %c0_32 = arith.constant 0 : index
    %c0_33 = arith.constant 0 : index
    %67 = vector.load %arg3[%c1_31, %c0_32, %c0_33] : memref<4x1x128xf32, #tpu.memory_space<vmem>>, vector<1x1x128xf32>
    %68 = vector.shape_cast %67 : vector<1x1x128xf32> to vector<1x128xf32>
    %cst_34 = arith.constant 9.99999974E-6 : f32
    %69 = vector.broadcast %cst_34 : f32 to vector<1x128xf32>
    %70 = arith.addf %66, %69 : vector<1x128xf32>
    %71 = math.rsqrt %70 : vector<1x128xf32>
    %72 = arith.mulf %68, %71 : vector<1x128xf32>
    %c1_35 = arith.constant 1 : index
    %c0_36 = arith.constant 0 : index
    %c0_37 = arith.constant 0 : index
    %73 = vector.load %arg4[%c1_35, %c0_36, %c0_37] : memref<4x1x128xf32, #tpu.memory_space<vmem>>, vector<1x1x128xf32>
    %74 = vector.shape_cast %73 : vector<1x1x128xf32> to vector<1x128xf32>
    %75 = arith.mulf %60, %72 : vector<1x128xf32>
    %76 = arith.subf %74, %75 : vector<1x128xf32>
    %77 = vector.broadcast %72 : vector<1x128xf32> to vector<40x128xf32>
    %78 = arith.mulf %49, %77 : vector<40x128xf32>
    %79 = vector.broadcast %76 : vector<1x128xf32> to vector<40x128xf32>
    %80 = arith.addf %78, %79 : vector<40x128xf32>
    %cst_38 = arith.constant 0.000000e+00 : f32
    %81 = vector.broadcast %cst_38 : f32 to vector<40x128xf32>
    %82 = arith.maximumf %80, %81 : vector<40x128xf32>
    %83 = vector.broadcast %51 : vector<40x1xf32> to vector<40x128xf32>
    %84 = arith.mulf %82, %83 : vector<40x128xf32>
    %c38_i32_39 = arith.constant 38 : i32
    %85 = tpu.dynamic_rotate %84 by %c38_i32_39 dim 0 : vector<40x128xf32>, i32 -> vector<40x128xf32>
    %c2_i32_40 = arith.constant 2 : i32
    %86 = tpu.dynamic_rotate %84 by %c2_i32_40 dim 0 : vector<40x128xf32>, i32 -> vector<40x128xf32>
    %87 = tpu.concatenate %85, %84, %86 in 1 : vector<40x128xf32>, vector<40x128xf32>, vector<40x128xf32> -> vector<40x384xf32>
    %88 = arith.truncf %87 : vector<40x384xf32> to vector<40x384xbf16>
    %c2 = arith.constant 2 : index
    %c0_41 = arith.constant 0 : index
    %c0_42 = arith.constant 0 : index
    %89 = vector.load %arg2[%c2, %c0_41, %c0_42] : memref<4x384x128xbf16, #tpu.memory_space<vmem>>, vector<1x384x128xbf16>
    %90 = vector.shape_cast %89 : vector<1x384x128xbf16> to vector<384x128xbf16>
    %cst_43 = arith.constant dense<0.000000e+00> : vector<40x128xf32>
    %91 = tpu.matmul %88, %90, %cst_43 {dimension_numbers = #tpu.dot_dimension_numbers<[1], [0], [0], [1], [0, 0, 1, 1], [], []>} : vector<40x384xbf16>, vector<384x128xbf16>, vector<40x128xf32> -> vector<40x128xf32>
    %c2_44 = arith.constant 2 : index
    %c0_45 = arith.constant 0 : index
    %c0_46 = arith.constant 0 : index
    %92 = vector.load %arg5[%c2_44, %c0_45, %c0_46] : memref<4x40x1xf32, #tpu.memory_space<vmem>>, vector<1x40x1xf32>
    %93 = vector.shape_cast %92 : vector<1x40x1xf32> to vector<40x1xf32>
    %94 = vector.broadcast %93 : vector<40x1xf32> to vector<40x128xf32>
    %95 = arith.mulf %91, %94 : vector<40x128xf32>
    %cst_47 = arith.constant dense<0.000000e+00> : vector<128xf32>
    %96 = vector.multi_reduction <add>, %95, %cst_47 [0] : vector<40x128xf32> to vector<128xf32>
    %97 = vector.shape_cast %96 : vector<128xf32> to vector<1x128xf32>
    %98 = arith.mulf %95, %95 : vector<40x128xf32>
    %cst_48 = arith.constant dense<0.000000e+00> : vector<128xf32>
    %99 = vector.multi_reduction <add>, %98, %cst_48 [0] : vector<40x128xf32> to vector<128xf32>
    %100 = vector.shape_cast %99 : vector<128xf32> to vector<1x128xf32>
    %cst_49 = arith.constant 6.250000e-02 : f32
    %101 = vector.broadcast %cst_49 : f32 to vector<1x128xf32>
    %102 = arith.mulf %97, %101 : vector<1x128xf32>
    %cst_50 = arith.constant 6.250000e-02 : f32
    %103 = vector.broadcast %cst_50 : f32 to vector<1x128xf32>
    %104 = arith.mulf %100, %103 : vector<1x128xf32>
    %105 = arith.mulf %102, %102 : vector<1x128xf32>
    %106 = arith.subf %104, %105 : vector<1x128xf32>
    %cst_51 = arith.constant 0.000000e+00 : f32
    %107 = vector.broadcast %cst_51 : f32 to vector<1x128xf32>
    %108 = arith.maximumf %106, %107 : vector<1x128xf32>
    %c2_52 = arith.constant 2 : index
    %c0_53 = arith.constant 0 : index
    %c0_54 = arith.constant 0 : index
    %109 = vector.load %arg3[%c2_52, %c0_53, %c0_54] : memref<4x1x128xf32, #tpu.memory_space<vmem>>, vector<1x1x128xf32>
    %110 = vector.shape_cast %109 : vector<1x1x128xf32> to vector<1x128xf32>
    %cst_55 = arith.constant 9.99999974E-6 : f32
    %111 = vector.broadcast %cst_55 : f32 to vector<1x128xf32>
    %112 = arith.addf %108, %111 : vector<1x128xf32>
    %113 = math.rsqrt %112 : vector<1x128xf32>
    %114 = arith.mulf %110, %113 : vector<1x128xf32>
    %c2_56 = arith.constant 2 : index
    %c0_57 = arith.constant 0 : index
    %c0_58 = arith.constant 0 : index
    %115 = vector.load %arg4[%c2_56, %c0_57, %c0_58] : memref<4x1x128xf32, #tpu.memory_space<vmem>>, vector<1x1x128xf32>
    %116 = vector.shape_cast %115 : vector<1x1x128xf32> to vector<1x128xf32>
    %117 = arith.mulf %102, %114 : vector<1x128xf32>
    %118 = arith.subf %116, %117 : vector<1x128xf32>
    %119 = vector.broadcast %114 : vector<1x128xf32> to vector<40x128xf32>
    %120 = arith.mulf %91, %119 : vector<40x128xf32>
    %121 = vector.broadcast %118 : vector<1x128xf32> to vector<40x128xf32>
    %122 = arith.addf %120, %121 : vector<40x128xf32>
    %cst_59 = arith.constant 0.000000e+00 : f32
    %123 = vector.broadcast %cst_59 : f32 to vector<40x128xf32>
    %124 = arith.maximumf %122, %123 : vector<40x128xf32>
    %125 = vector.broadcast %93 : vector<40x1xf32> to vector<40x128xf32>
    %126 = arith.mulf %124, %125 : vector<40x128xf32>
    %c39_i32_60 = arith.constant 39 : i32
    %127 = tpu.dynamic_rotate %126 by %c39_i32_60 dim 0 : vector<40x128xf32>, i32 -> vector<40x128xf32>
    %c1_i32_61 = arith.constant 1 : i32
    %128 = tpu.dynamic_rotate %126 by %c1_i32_61 dim 0 : vector<40x128xf32>, i32 -> vector<40x128xf32>
    %129 = tpu.concatenate %127, %126, %128 in 1 : vector<40x128xf32>, vector<40x128xf32>, vector<40x128xf32> -> vector<40x384xf32>
    %130 = arith.truncf %129 : vector<40x384xf32> to vector<40x384xbf16>
    %c3 = arith.constant 3 : index
    %c0_62 = arith.constant 0 : index
    %c0_63 = arith.constant 0 : index
    %131 = vector.load %arg2[%c3, %c0_62, %c0_63] : memref<4x384x128xbf16, #tpu.memory_space<vmem>>, vector<1x384x128xbf16>
    %132 = vector.shape_cast %131 : vector<1x384x128xbf16> to vector<384x128xbf16>
    %cst_64 = arith.constant dense<0.000000e+00> : vector<40x128xf32>
    %133 = tpu.matmul %130, %132, %cst_64 {dimension_numbers = #tpu.dot_dimension_numbers<[1], [0], [0], [1], [0, 0, 1, 1], [], []>} : vector<40x384xbf16>, vector<384x128xbf16>, vector<40x128xf32> -> vector<40x128xf32>
    %c3_65 = arith.constant 3 : index
    %c0_66 = arith.constant 0 : index
    %c0_67 = arith.constant 0 : index
    %134 = vector.load %arg5[%c3_65, %c0_66, %c0_67] : memref<4x40x1xf32, #tpu.memory_space<vmem>>, vector<1x40x1xf32>
    %135 = vector.shape_cast %134 : vector<1x40x1xf32> to vector<40x1xf32>
    %136 = vector.broadcast %135 : vector<40x1xf32> to vector<40x128xf32>
    %137 = arith.mulf %133, %136 : vector<40x128xf32>
    %cst_68 = arith.constant dense<0.000000e+00> : vector<128xf32>
    %138 = vector.multi_reduction <add>, %137, %cst_68 [0] : vector<40x128xf32> to vector<128xf32>
    %139 = vector.shape_cast %138 : vector<128xf32> to vector<1x128xf32>
    %140 = arith.mulf %137, %137 : vector<40x128xf32>
    %cst_69 = arith.constant dense<0.000000e+00> : vector<128xf32>
    %141 = vector.multi_reduction <add>, %140, %cst_69 [0] : vector<40x128xf32> to vector<128xf32>
    %142 = vector.shape_cast %141 : vector<128xf32> to vector<1x128xf32>
    %cst_70 = arith.constant 3.125000e-02 : f32
    %143 = vector.broadcast %cst_70 : f32 to vector<1x128xf32>
    %144 = arith.mulf %139, %143 : vector<1x128xf32>
    %cst_71 = arith.constant 3.125000e-02 : f32
    %145 = vector.broadcast %cst_71 : f32 to vector<1x128xf32>
    %146 = arith.mulf %142, %145 : vector<1x128xf32>
    %147 = arith.mulf %144, %144 : vector<1x128xf32>
    %148 = arith.subf %146, %147 : vector<1x128xf32>
    %cst_72 = arith.constant 0.000000e+00 : f32
    %149 = vector.broadcast %cst_72 : f32 to vector<1x128xf32>
    %150 = arith.maximumf %148, %149 : vector<1x128xf32>
    %c3_73 = arith.constant 3 : index
    %c0_74 = arith.constant 0 : index
    %c0_75 = arith.constant 0 : index
    %151 = vector.load %arg3[%c3_73, %c0_74, %c0_75] : memref<4x1x128xf32, #tpu.memory_space<vmem>>, vector<1x1x128xf32>
    %152 = vector.shape_cast %151 : vector<1x1x128xf32> to vector<1x128xf32>
    %cst_76 = arith.constant 9.99999974E-6 : f32
    %153 = vector.broadcast %cst_76 : f32 to vector<1x128xf32>
    %154 = arith.addf %150, %153 : vector<1x128xf32>
    %155 = math.rsqrt %154 : vector<1x128xf32>
    %156 = arith.mulf %152, %155 : vector<1x128xf32>
    %c3_77 = arith.constant 3 : index
    %c0_78 = arith.constant 0 : index
    %c0_79 = arith.constant 0 : index
    %157 = vector.load %arg4[%c3_77, %c0_78, %c0_79] : memref<4x1x128xf32, #tpu.memory_space<vmem>>, vector<1x1x128xf32>
    %158 = vector.shape_cast %157 : vector<1x1x128xf32> to vector<1x128xf32>
    %159 = arith.mulf %144, %156 : vector<1x128xf32>
    %160 = arith.subf %158, %159 : vector<1x128xf32>
    %161 = vector.broadcast %156 : vector<1x128xf32> to vector<40x128xf32>
    %162 = arith.mulf %133, %161 : vector<40x128xf32>
    %163 = vector.broadcast %160 : vector<1x128xf32> to vector<40x128xf32>
    %164 = arith.addf %162, %163 : vector<40x128xf32>
    %cst_80 = arith.constant 0.000000e+00 : f32
    %165 = vector.broadcast %cst_80 : f32 to vector<40x128xf32>
    %166 = arith.maximumf %164, %165 : vector<40x128xf32>
    %167 = vector.broadcast %135 : vector<40x1xf32> to vector<40x128xf32>
    %168 = arith.mulf %166, %167 : vector<40x128xf32>
    %c0_81 = arith.constant 0 : index
    %c0_82 = arith.constant 0 : index
    %169 = vector.load %arg6[%c0_81, %c0_82] : memref<40x128xf32, #tpu.memory_space<vmem>>, vector<40x128xf32>
    tpu.vector_store %arg6[%c0_81, %c0_82], %168 {strides = array<i32>} : memref<40x128xf32, #tpu.memory_space<vmem>>, vector<40x128xf32>,
    return
  }
  func.func @transform_0(%arg0: i32) -> (i32, i32) {
    %c0_i32 = arith.constant 0 : i32
    %c0_i32_0 = arith.constant 0 : i32
    %c0_i32_1 = arith.constant 0 : i32
    return %c0_i32, %c0_i32_0 : i32, i32
  }
  func.func @transform_1(%arg0: i32) -> (i32, i32, i32) {
    %c0_i32 = arith.constant 0 : i32
    %c0_i32_0 = arith.constant 0 : i32
    %c0_i32_1 = arith.constant 0 : i32
    %c0_i32_2 = arith.constant 0 : i32
    return %c0_i32, %c0_i32_0, %c0_i32_1 : i32, i32, i32
  }
  func.func @transform_2(%arg0: i32) -> (i32, i32, i32) {
    %c0_i32 = arith.constant 0 : i32
    %c0_i32_0 = arith.constant 0 : i32
    %c0_i32_1 = arith.constant 0 : i32
    %c0_i32_2 = arith.constant 0 : i32
    return %c0_i32, %c0_i32_0, %c0_i32_1 : i32, i32, i32
  }
  func.func @transform_3(%arg0: i32) -> (i32, i32, i32) {
    %c0_i32 = arith.constant 0 : i32
    %c0_i32_0 = arith.constant 0 : i32
    %c0_i32_1 = arith.constant 0 : i32
    %c0_i32_2 = arith.constant 0 : i32
    return %c0_i32, %c0_i32_0, %c0_i32_1 : i32, i32, i32
  }
  func.func @transform_4(%arg0: i32) -> (i32, i32, i32) {
    %c0_i32 = arith.constant 0 : i32
    %c0_i32_0 = arith.constant 0 : i32
    %c0_i32_1 = arith.constant 0 : i32
    %c0_i32_2 = arith.constant 0 : i32
    return %c0_i32, %c0_i32_0, %c0_i32_1 : i32, i32, i32
  }
  func.func @transform_5(%arg0: i32) -> (i32, i32) {
    %c0_i32 = arith.constant 0 : i32
    %c0_i32_0 = arith.constant 0 : i32
    %c0_i32_1 = arith.constant 0 : i32
    return %c0_i32, %c0_i32_0 : i32, i32
  }
}

</mosaic_0001>

<llo_original>
// kernel: forward.1
$region0: #{forward.1}
  #allocation0 [shape = 'u32[]', space=smem, size = 0x4, offset = 0x4, fixed_abs, tag = 'smem constant byte address 0x4 - core index']
  #allocation1 [shape = 'u32[72,128]{1,0:T(1,128)}', space=vmem, size = 0x9000, scoped, tag = 'internal scratch']
  %s0 = inlined_call_operand.vmem [shape: f32[40,128], index: 0, kind: input, shape index: {}]
  %s1 = inlined_call_operand.hbm [shape: bf16[4,384,128], index: 1, kind: input, shape index: {}]
  %s2 = inlined_call_operand.vmem [shape: f32[4,1,128], index: 2, kind: input, shape index: {}]
  %s3 = inlined_call_operand.vmem [shape: f32[4,1,128], index: 3, kind: input, shape index: {}]
  %s4 = inlined_call_operand.vmem [shape: f32[4,40,1], index: 4, kind: input, shape index: {}]
  %s5 = inlined_call_operand.vmem [shape: f32[40,128], index: 5, kind: output, shape index: {}]
  %s6 = sld [smem:[#allocation0]]
  $region34: #{forward.1} parent=0
    _
  %s8 = ssub.s32 1, %s6
  %s9 = scalar_select 0, %s8, %s6
  $region1: #{forward.1} parent=0
    #allocation2 [shape = 'u8[393216]{0}', space=vmem, size = 0x60000, scoped, tag = 'input window, operand 1, single buffered']
    #allocation3 [shape = 's32[1]{0}', space=sflag, size = 0x4, scoped, tag = 'scoped memory for forward.1']
    %10 = vsyncpa [#allocation3], 0
    // Predicated region
    $region2: #{forward.1} parent=1 // pred_check
      _
    $region3: #{forward.1} parent=1 // pred_check_branch
      %12 = sbr.rel (0) target = $region5
    $region4: #{forward.1} parent=1 // pred_region
      _
    $region5: #{forward.1} parent=1 // pred_fallthru
      _
    // Predicated region
    $region6: #{forward.1} parent=1 // pred_check
      _
    $region7: #{forward.1} parent=1 // pred_check_branch
      %14 = sbr.rel (0) target = $region9
    $region8: #{forward.1} parent=1 // pred_region
      %16 = vsyncadd [#allocation3], 0
      %s17 = sshll.u32 %s1, 4
      %s18 = int_to_ptr.hbm [resolvable:$true] %s17
      %s19 = sshll.u32 [#allocation2], 4
      %s20 = int_to_ptr.vmem [resolvable:$true] %s19
      %25 = dma.hbm_to_vmem [thread:$0]  %s18, 12288, %s20, [#allocation3], 64, 64, 4
    $region9: #{forward.1} parent=1 // pred_fallthru
      _
    // Predicated region
    $region10: #{forward.1} parent=1 // pred_check
      _
    $region11: #{forward.1} parent=1 // pred_check_branch
      %27 = sbr.rel (0) target = $region13
    $region12: #{forward.1} parent=1 // pred_region
      _
    $region13: #{forward.1} parent=1 // pred_fallthru
      _
    // Predicated region
    $region14: #{forward.1} parent=1 // pred_check
      _
    $region15: #{forward.1} parent=1 // pred_check_branch
      %29 = sbr.rel (0) target = $region17
    $region16: #{forward.1} parent=1 // pred_region
      _
    $region17: #{forward.1} parent=1 // pred_fallthru
      _
    // Predicated region
    $region18: #{forward.1} parent=1 // pred_check
      _
    $region19: #{forward.1} parent=1 // pred_check_branch
      %31 = sbr.rel (0) target = $region21
    $region20: #{forward.1} parent=1 // pred_region
      _
    $region21: #{forward.1} parent=1 // pred_fallthru
      _
    // Predicated region
    $region22: #{forward.1} parent=1 // pred_check
      _
    $region23: #{forward.1} parent=1 // pred_check_branch
      %33 = sbr.rel (0) target = $region25
    $region24: #{forward.1} parent=1 // pred_region
      %35 = dma.done [#allocation3], 12288
    $region25: #{forward.1} parent=1 // pred_fallthru
      _
    %v36 = vld [vmem:[%s0] sm:$0xff]
    %v37 = vld [vmem:[%s0 + $0x8] sm:$0xff]
    %v38 = vld [vmem:[%s0 + $0x10] sm:$0xff]
    %v39 = vld [vmem:[%s0 + $0x18] sm:$0xff]
    %v40 = vld [vmem:[%s0 + $0x20] sm:$0xff]
    %v41 = vrot.slane %v36, 7
    %v42 = vrot.slane %v37, 7
    %v43 = vrot.slane %v38, 7
    %v44 = vrot.slane %v39, 7
    %v45 = vrot.slane %v40, 7
    %v46 = vlaneseq
    %v47 = vshrl.u32 %v46, 7
    %vm48 = vcmp.lt.s32.totalorder %v47, 1
    %v49 = vsel %vm48, %v44, %v45
    %v50 = vsel %vm48, %v43, %v44
    %v51 = vsel %vm48, %v42, %v43
    %v52 = vsel %vm48, %v41, %v42
    %v53 = vsel %vm48, %v45, %v41
    %v54 = vrot.slane %v36, 1
    %v55 = vrot.slane %v37, 1
    %v56 = vrot.slane %v38, 1
    %v57 = vrot.slane %v39, 1
    %v58 = vrot.slane %v40, 1
    %vm59 = vcmp.lt.s32.totalorder %v47, 7
    %v60 = vsel %vm59, %v57, %v58
    %v61 = vsel %vm59, %v56, %v57
    %v62 = vsel %vm59, %v55, %v56
    %v63 = vsel %vm59, %v54, %v55
    %v64 = vsel %vm59, %v58, %v54
    %v65 = vpack.c.bf16 %v52, %v53
    %v66 = vpack.c.bf16 %v37, %v36
    %v67 = vpack.c.bf16 %v62, %v63
    %v68 = vpack.c.bf16 %v50, %v51
    %v69 = vpack.c.bf16 %v39, %v38
    %v70 = vpack.c.bf16 %v60, %v61
    %v71 = vpack.c.bf16 %v49, %v49
    %v72 = vpack.c.bf16 %v40, %v40
    %v73 = vpack.c.bf16 %v64, %v64
    %v74 = vld [vmem:[#allocation2] sm:$0xf]
    %v75 = vld [vmem:[#allocation2 + $0x4] sm:$0xf]
    %v76 = vld [vmem:[#allocation2 + $0x8] sm:$0xf]
    %v77 = vld [vmem:[#allocation2 + $0xc] sm:$0xf]
    %v78 = vld [vmem:[#allocation2 + $0x10] sm:$0xf]
    %v79 = vld [vmem:[#allocation2 + $0x14] sm:$0xf]
    %v80 = vld [vmem:[#allocation2 + $0x18] sm:$0xf]
    %v81 = vld [vmem:[#allocation2 + $0x1c] sm:$0xf]
    %v82 = vld [vmem:[#allocation2 + $0x20] sm:$0xf]
    %v83 = vld [vmem:[#allocation2 + $0x24] sm:$0xf]
    %v84 = vld [vmem:[#allocation2 + $0x28] sm:$0xf]
    %v85 = vld [vmem:[#allocation2 + $0x2c] sm:$0xf]
    %v86 = vld [vmem:[#allocation2 + $0x30] sm:$0xf]
    %v87 = vld [vmem:[#allocation2 + $0x34] sm:$0xf]
    %v88 = vld [vmem:[#allocation2 + $0x38] sm:$0xf]
    %v89 = vld [vmem:[#allocation2 + $0x3c] sm:$0xf]
    %v90 = vld [vmem:[#allocation2 + $0x40] sm:$0xf]
    %v91 = vld [vmem:[#allocation2 + $0x44] sm:$0xf]
    %v92 = vld [vmem:[#allocation2 + $0x48] sm:$0xf]
    %v93 = vld [vmem:[#allocation2 + $0x4c] sm:$0xf]
    %v94 = vld [vmem:[#allocation2 + $0x50] sm:$0xf]
    %v95 = vld [vmem:[#allocation2 + $0x54] sm:$0xf]
    %v96 = vld [vmem:[#allocation2 + $0x58] sm:$0xf]
    %v97 = vld [vmem:[#allocation2 + $0x5c] sm:$0xf]
    %v98 = vld [vmem:[#allocation2 + $0x60] sm:$0xf]
    %v99 = vld [vmem:[#allocation2 + $0x64] sm:$0xf]
    %v100 = vld [vmem:[#allocation2 + $0x68] sm:$0xf]
    %v101 = vld [vmem:[#allocation2 + $0x6c] sm:$0xf]
    %v102 = vld [vmem:[#allocation2 + $0x70] sm:$0xf]
    %v103 = vld [vmem:[#allocation2 + $0x74] sm:$0xf]
    %v104 = vld [vmem:[#allocation2 + $0x78] sm:$0xf]
    %v105 = vld [vmem:[#allocation2 + $0x7c] sm:$0xf]
    %v106 = vld [vmem:[#allocation2 + $0x80] sm:$0xf]
    %v107 = vld [vmem:[#allocation2 + $0x84] sm:$0xf]
    %v108 = vld [vmem:[#allocation2 + $0x88] sm:$0xf]
    %v109 = vld [vmem:[#allocation2 + $0x8c] sm:$0xf]
    %v110 = vld [vmem:[#allocation2 + $0x90] sm:$0xf]
    %v111 = vld [vmem:[#allocation2 + $0x94] sm:$0xf]
    %v112 = vld [vmem:[#allocation2 + $0x98] sm:$0xf]
    %v113 = vld [vmem:[#allocation2 + $0x9c] sm:$0xf]
    %v114 = vld [vmem:[#allocation2 + $0xa0] sm:$0xf]
    %v115 = vld [vmem:[#allocation2 + $0xa4] sm:$0xf]
    %v116 = vld [vmem:[#allocation2 + $0xa8] sm:$0xf]
    %v117 = vld [vmem:[#allocation2 + $0xac] sm:$0xf]
    %v118 = vld [vmem:[#allocation2 + $0xb0] sm:$0xf]
    %v119 = vld [vmem:[#allocation2 + $0xb4] sm:$0xf]
    %v120 = vld [vmem:[#allocation2 + $0xb8] sm:$0xf]
    %v121 = vld [vmem:[#allocation2 + $0xbc] sm:$0xf]
    %v170 = vunpack.c.l.b16 %v74
    %v171 = vunpack.c.l.b16 %v75
    %v172 = vunpack.c.l.b16 %v76
    %v173 = vunpack.c.l.b16 %v77
    %v174 = vunpack.c.l.b16 %v78
    %v175 = vunpack.c.l.b16 %v79
    %v176 = vunpack.c.l.b16 %v80
    %v177 = vunpack.c.l.b16 %v81
    %v178 = vunpack.c.l.b16 %v82
    %v179 = vunpack.c.l.b16 %v83
    %v180 = vunpack.c.l.b16 %v84
    %v181 = vunpack.c.l.b16 %v85
    %v182 = vunpack.c.l.b16 %v86
    %v183 = vunpack.c.l.b16 %v87
    %v184 = vunpack.c.l.b16 %v88
    %v185 = vunpack.c.l.b16 %v89
    %v186 = vunpack.c.l.b16 %v90
    %v187 = vunpack.c.l.b16 %v91
    %v188 = vunpack.c.l.b16 %v92
    %v189 = vunpack.c.l.b16 %v93
    %v190 = vunpack.c.l.b16 %v94
    %v191 = vunpack.c.l.b16 %v95
    %v192 = vunpack.c.l.b16 %v96
    %v193 = vunpack.c.l.b16 %v97
    %v194 = vunpack.c.l.b16 %v98
    %v195 = vunpack.c.l.b16 %v99
    %v196 = vunpack.c.l.b16 %v100
    %v197 = vunpack.c.l.b16 %v101
    %v198 = vunpack.c.l.b16 %v102
    %v199 = vunpack.c.l.b16 %v103
    %v200 = vunpack.c.l.b16 %v104
    %v201 = vunpack.c.l.b16 %v105
    %v202 = vunpack.c.l.b16 %v106
    %v203 = vunpack.c.l.b16 %v107
    %v204 = vunpack.c.l.b16 %v108
    %v205 = vunpack.c.l.b16 %v109
    %v206 = vunpack.c.l.b16 %v110
    %v207 = vunpack.c.l.b16 %v111
    %v208 = vunpack.c.l.b16 %v112
    %v209 = vunpack.c.l.b16 %v113
    %v210 = vunpack.c.l.b16 %v114
    %v211 = vunpack.c.l.b16 %v115
    %v212 = vunpack.c.l.b16 %v116
    %v213 = vunpack.c.l.b16 %v117
    %v214 = vunpack.c.l.b16 %v118
    %v215 = vunpack.c.l.b16 %v119
    %v216 = vunpack.c.l.b16 %v120
    %v217 = vunpack.c.l.b16 %v121
    %v218 = vpack.c.b16 %v171, %v170
    %v219 = vpack.c.b16 %v173, %v172
    %v220 = vpack.c.b16 %v175, %v174
    %v221 = vpack.c.b16 %v177, %v176
    %v222 = vpack.c.b16 %v179, %v178
    %v223 = vpack.c.b16 %v181, %v180
    %v224 = vpack.c.b16 %v183, %v182
    %v225 = vpack.c.b16 %v185, %v184
    %v226 = vpack.c.b16 %v187, %v186
    %v227 = vpack.c.b16 %v189, %v188
    %v228 = vpack.c.b16 %v191, %v190
    %v229 = vpack.c.b16 %v193, %v192
    %v230 = vpack.c.b16 %v195, %v194
    %v231 = vpack.c.b16 %v197, %v196
    %v232 = vpack.c.b16 %v199, %v198
    %v233 = vpack.c.b16 %v201, %v200
    %v234 = vpack.c.b16 %v203, %v202
    %v235 = vpack.c.b16 %v205, %v204
    %v236 = vpack.c.b16 %v207, %v206
    %v237 = vpack.c.b16 %v209, %v208
    %v238 = vpack.c.b16 %v211, %v210
    %v239 = vpack.c.b16 %v213, %v212
    %v240 = vpack.c.b16 %v215, %v214
    %v241 = vpack.c.b16 %v217, %v216
    %266 = vmatpush.bf16.msra.mxu0 %v225
    %267 = vmatpush.bf16.msra.mxu0 %v224
    %268 = vmatpush.bf16.msra.mxu0 %v223
    %269 = vmatpush.bf16.msra.mxu0 %v222
    %270 = vmatpush.bf16.msra.mxu0 %v221
    %271 = vmatpush.bf16.msra.mxu0 %v220
    %272 = vmatpush.bf16.msra.mxu0 %v219
    %273 = vmatpush.bf16.msra.mxu0 %v218
    %274 = vmatmul.bf16.gmra.mxu0 %v65
    %v275 = vpop.f32.mrf.mxu0
    %v276 = vadd.f32 0.0, %v275
    %v277 = vpop.f32.mrf.mxu0
    %v278 = vadd.f32 0.0, %v277
    %279 = vmatmul.bf16.gmra.mxu0 %v68
    %v280 = vpop.f32.mrf.mxu0
    %v281 = vadd.f32 0.0, %v280
    %v282 = vpop.f32.mrf.mxu0
    %v283 = vadd.f32 0.0, %v282
    %284 = vmatmul.bf16.gmra.mxu0 %v71
    %v285 = vpop.f32.mrf.mxu0
    %v286 = vadd.f32 0.0, %v285
    %v287 = vpop.f32.mrf.mxu0
    %288 = vdwg.mxu0
    %289 = vmatpush.bf16.msra.mxu0 %v233
    %290 = vmatpush.bf16.msra.mxu0 %v232
    %291 = vmatpush.bf16.msra.mxu0 %v231
    %292 = vmatpush.bf16.msra.mxu0 %v230
    %293 = vmatpush.bf16.msra.mxu0 %v229
    %294 = vmatpush.bf16.msra.mxu0 %v228
    %295 = vmatpush.bf16.msra.mxu0 %v227
    %296 = vmatpush.bf16.msra.mxu0 %v226
    %297 = vmatmul.bf16.gmra.mxu0 %v66
    %v298 = vpop.f32.mrf.mxu0
    %v299 = vadd.f32 %v276, %v298
    %v300 = vpop.f32.mrf.mxu0
    %v301 = vadd.f32 %v278, %v300
    %302 = vmatmul.bf16.gmra.mxu0 %v69
    %v303 = vpop.f32.mrf.mxu0
    %v304 = vadd.f32 %v281, %v303
    %v305 = vpop.f32.mrf.mxu0
    %v306 = vadd.f32 %v283, %v305
    %307 = vmatmul.bf16.gmra.mxu0 %v72
    %v308 = vpop.f32.mrf.mxu0
    %v309 = vadd.f32 %v286, %v308
    %v310 = vpop.f32.mrf.mxu0
    %311 = vdwg.mxu0
    %312 = vmatpush.bf16.msra.mxu0 %v241
    %313 = vmatpush.bf16.msra.mxu0 %v240
    %314 = vmatpush.bf16.msra.mxu0 %v239
    %315 = vmatpush.bf16.msra.mxu0 %v238
    %316 = vmatpush.bf16.msra.mxu0 %v237
    %317 = vmatpush.bf16.msra.mxu0 %v236
    %318 = vmatpush.bf16.msra.mxu0 %v235
    %319 = vmatpush.bf16.msra.mxu0 %v234
    %320 = vmatmul.bf16.gmra.mxu0 %v67
    %v321 = vpop.f32.mrf.mxu0
    %v322 = vadd.f32 %v299, %v321
    %v323 = vpop.f32.mrf.mxu0
    %v324 = vadd.f32 %v301, %v323
    %325 = vmatmul.bf16.gmra.mxu0 %v70
    %v326 = vpop.f32.mrf.mxu0
    %v327 = vadd.f32 %v304, %v326
    %v328 = vpop.f32.mrf.mxu0
    %v329 = vadd.f32 %v306, %v328
    %330 = vmatmul.bf16.gmra.mxu0 %v73
    %v331 = vpop.f32.mrf.mxu0
    %v332 = vadd.f32 %v309, %v331
    %v333 = vpop.f32.mrf.mxu0
    %334 = vdwg.mxu0
    %v335 = vld [vmem:[%s4] sm:$0xff]
    %v336 = vld [vmem:[%s4 + $0x8] sm:$0xff]
    %v337 = vld [vmem:[%s4 + $0x10] sm:$0xff]
    %v338 = vld [vmem:[%s4 + $0x18] sm:$0xff]
    %v339 = vld [vmem:[%s4 + $0x20] sm:$0xff]
    %341 = vset.pattern.permute.xlu0 0
    %342 = vperm.xlu0 %341, %v335
    %v343 = vpop.permute.xlu0 %342
    %346 = vset.pattern.permute.xlu0 0
    %347 = vperm.xlu0 %346, %v336
    %v348 = vpop.permute.xlu0 %347
    %351 = vset.pattern.permute.xlu0 0
    %352 = vperm.xlu0 %351, %v337
    %v353 = vpop.permute.xlu0 %352
    %356 = vset.pattern.permute.xlu0 0
    %357 = vperm.xlu0 %356, %v338
    %v358 = vpop.permute.xlu0 %357
    %361 = vset.pattern.permute.xlu0 0
    %362 = vperm.xlu0 %361, %v339
    %v363 = vpop.permute.xlu0 %362
    %v365 = vmul.f32 %v322, %v343
    %v366 = vmul.f32 %v324, %v348
    %v367 = vmul.f32 %v327, %v353
    %v368 = vmul.f32 %v329, %v358
    %v369 = vmul.f32 %v332, %v363
    %v370 = vadd.f32 %v365, %v366
    %v371 = vadd.f32 %v370, %v367
    %v372 = vadd.f32 %v371, %v368
    %v373 = vadd.f32 %v372, %v369
    %v374 = vrot.slane %v373, 4
    %v375 = vadd.f32 %v373, %v374
    %v376 = vrot.slane %v375, 2
    %v377 = vadd.f32 %v375, %v376
    %v378 = vrot.slane %v377, 1
    %v379 = vadd.f32 %v377, %v378
    %v380 = vmul.f32 %v365, %v365
    %v381 = vmul.f32 %v366, %v366
    %v382 = vmul.f32 %v367, %v367
    %v383 = vmul.f32 %v368, %v368
    %v384 = vmul.f32 %v369, %v369
    %v385 = vadd.f32 %v380, %v381
    %v386 = vadd.f32 %v385, %v382
    %v387 = vadd.f32 %v386, %v383
    %v388 = vadd.f32 %v387, %v384
    %v389 = vrot.slane %v388, 4
    %v390 = vadd.f32 %v388, %v389
    %v391 = vrot.slane %v390, 2
    %v392 = vadd.f32 %v390, %v391
    %v393 = vrot.slane %v392, 1
    %v394 = vadd.f32 %v392, %v393
    %v395 = vmul.f32 %v379, 0.0625
    %v396 = vmul.f32 %v394, 0.0625
    %v397 = vmul.f32 %v395, %v395
    %v398 = vsub.f32 %v396, %v397
    %v399 = vmax.f32 %v398, 0.0
    %v400 = vld [vmem:[%s2] sm:$0x1]
    %v401 = vadd.f32 %v399, 1e-05
    %v402 = vrsqrt.pop %v401
    %v403 = vmul.f32 %v402, %v401
    %v404 = vmul.f32 %v403, %v402
    %v405 = vmul.f32 0.5, %v404
    %v406 = vsub.f32 1.5, %v405
    %v407 = vmul.f32 %v402, %v406
    %vm408 = vweird.f32 %v401
    %vm409 = vweird.f32 %v402
    %vm410 = vmor %vm408, %vm409
    %v411 = vsel %vm410, %v402, %v407
    %v412 = vmul.f32 %v400, %v411
    %v413 = vld [vmem:[%s3] sm:$0x1]
    %v414 = vmul.f32 %v395, %v412
    %v415 = vsub.f32 %v413, %v414
    %v417 = vperm.slane %v412, 0
    %v419 = vmul.f32 %v322, %v417
    %v420 = vmul.f32 %v324, %v417
    %v421 = vmul.f32 %v327, %v417
    %v422 = vmul.f32 %v329, %v417
    %v423 = vmul.f32 %v332, %v417
    %v425 = vperm.slane %v415, 0
    %v427 = vadd.f32 %v419, %v425
    %v428 = vadd.f32 %v420, %v425
    %v429 = vadd.f32 %v421, %v425
    %v430 = vadd.f32 %v422, %v425
    %v431 = vadd.f32 %v423, %v425
    %v432 = vmax.f32 %v427, 0.0
    %v433 = vmax.f32 %v428, 0.0
    %v434 = vmax.f32 %v429, 0.0
    %v435 = vmax.f32 %v430, 0.0
    %v436 = vmax.f32 %v431, 0.0
    %v437 = vmul.f32 %v432, %v343
    %v438 = vmul.f32 %v433, %v348
    %v439 = vmul.f32 %v434, %v353
    %v440 = vmul.f32 %v435, %v358
    %v441 = vmul.f32 %v436, %v363
    %v442 = vrot.slane %v437, 6
    %v443 = vrot.slane %v438, 6
    %v444 = vrot.slane %v439, 6
    %v445 = vrot.slane %v440, 6
    %v446 = vrot.slane %v441, 6
    %vm447 = vcmp.lt.s32.totalorder %v47, 2
    %v448 = vsel %vm447, %v445, %v446
    %v449 = vsel %vm447, %v444, %v445
    %v450 = vsel %vm447, %v443, %v444
    %v451 = vsel %vm447, %v442, %v443
    %v452 = vsel %vm447, %v446, %v442
    %v453 = vrot.slane %v437, 2
    %v454 = vrot.slane %v438, 2
    %v455 = vrot.slane %v439, 2
    %v456 = vrot.slane %v440, 2
    %v457 = vrot.slane %v441, 2
    %vm458 = vcmp.lt.s32.totalorder %v47, 6
    %v459 = vsel %vm458, %v456, %v457
    %v460 = vsel %vm458, %v455, %v456
    %v461 = vsel %vm458, %v454, %v455
    %v462 = vsel %vm458, %v453, %v454
    %v463 = vsel %vm458, %v457, %v453
    %v464 = vpack.c.bf16 %v451, %v452
    %v465 = vpack.c.bf16 %v438, %v437
    %v466 = vpack.c.bf16 %v461, %v462
    %v467 = vpack.c.bf16 %v449, %v450
    %v468 = vpack.c.bf16 %v440, %v439
    %v469 = vpack.c.bf16 %v459, %v460
    %v470 = vpack.c.bf16 %v448, %v448
    %v471 = vpack.c.bf16 %v441, %v441
    %v472 = vpack.c.bf16 %v463, %v463
    %s473 = scalar_lea.vmem [#allocation2], 192
    %v474 = vld [vmem:[%s473] sm:$0xf]
    %v475 = vld [vmem:[%s473 + $0x4] sm:$0xf]
    %v476 = vld [vmem:[%s473 + $0x8] sm:$0xf]
    %v477 = vld [vmem:[%s473 + $0xc] sm:$0xf]
    %v478 = vld [vmem:[%s473 + $0x10] sm:$0xf]
    %v479 = vld [vmem:[%s473 + $0x14] sm:$0xf]
    %v480 = vld [vmem:[%s473 + $0x18] sm:$0xf]
    %v481 = vld [vmem:[%s473 + $0x1c] sm:$0xf]
    %v482 = vld [vmem:[%s473 + $0x20] sm:$0xf]
    %v483 = vld [vmem:[%s473 + $0x24] sm:$0xf]
    %v484 = vld [vmem:[%s473 + $0x28] sm:$0xf]
    %v485 = vld [vmem:[%s473 + $0x2c] sm:$0xf]
    %v486 = vld [vmem:[%s473 + $0x30] sm:$0xf]
    %v487 = vld [vmem:[%s473 + $0x34] sm:$0xf]
    %v488 = vld [vmem:[%s473 + $0x38] sm:$0xf]
    %v489 = vld [vmem:[%s473 + $0x3c] sm:$0xf]
    %v490 = vld [vmem:[%s473 + $0x40] sm:$0xf]
    %v491 = vld [vmem:[%s473 + $0x44] sm:$0xf]
    %v492 = vld [vmem:[%s473 + $0x48] sm:$0xf]
    %v493 = vld [vmem:[%s473 + $0x4c] sm:$0xf]
    %v494 = vld [vmem:[%s473 + $0x50] sm:$0xf]
    %v495 = vld [vmem:[%s473 + $0x54] sm:$0xf]
    %v496 = vld [vmem:[%s473 + $0x58] sm:$0xf]
    %v497 = vld [vmem:[%s473 + $0x5c] sm:$0xf]
    %v498 = vld [vmem:[%s473 + $0x60] sm:$0xf]
    %v499 = vld [vmem:[%s473 + $0x64] sm:$0xf]
    %v500 = vld [vmem:[%s473 + $0x68] sm:$0xf]
    %v501 = vld [vmem:[%s473 + $0x6c] sm:$0xf]
    %v502 = vld [vmem:[%s473 + $0x70] sm:$0xf]
    %v503 = vld [vmem:[%s473 + $0x74] sm:$0xf]
    %v504 = vld [vmem:[%s473 + $0x78] sm:$0xf]
    %v505 = vld [vmem:[%s473 + $0x7c] sm:$0xf]
    %v506 = vld [vmem:[%s473 + $0x80] sm:$0xf]
    %v507 = vld [vmem:[%s473 + $0x84] sm:$0xf]
    %v508 = vld [vmem:[%s473 + $0x88] sm:$0xf]
    %v509 = vld [vmem:[%s473 + $0x8c] sm:$0xf]
    %v510 = vld [vmem:[%s473 + $0x90] sm:$0xf]
    %v511 = vld [vmem:[%s473 + $0x94] sm:$0xf]
    %v512 = vld [vmem:[%s473 + $0x98] sm:$0xf]
    %v513 = vld [vmem:[%s473 + $0x9c] sm:$0xf]
    %v514 = vld [vmem:[%s473 + $0xa0] sm:$0xf]
    %v515 = vld [vmem:[%s473 + $0xa4] sm:$0xf]
    %v516 = vld [vmem:[%s473 + $0xa8] sm:$0xf]
    %v517 = vld [vmem:[%s473 + $0xac] sm:$0xf]
    %v518 = vld [vmem:[%s473 + $0xb0] sm:$0xf]
    %v519 = vld [vmem:[%s473 + $0xb4] sm:$0xf]
    %v520 = vld [vmem:[%s473 + $0xb8] sm:$0xf]
    %v521 = vld [vmem:[%s473 + $0xbc] sm:$0xf]
    %v570 = vunpack.c.l.b16 %v474
    %v571 = vunpack.c.l.b16 %v475
    %v572 = vunpack.c.l.b16 %v476
    %v573 = vunpack.c.l.b16 %v477
    %v574 = vunpack.c.l.b16 %v478
    %v575 = vunpack.c.l.b16 %v479
    %v576 = vunpack.c.l.b16 %v480
    %v577 = vunpack.c.l.b16 %v481
    %v578 = vunpack.c.l.b16 %v482
    %v579 = vunpack.c.l.b16 %v483
    %v580 = vunpack.c.l.b16 %v484
    %v581 = vunpack.c.l.b16 %v485
    %v582 = vunpack.c.l.b16 %v486
    %v583 = vunpack.c.l.b16 %v487
    %v584 = vunpack.c.l.b16 %v488
    %v585 = vunpack.c.l.b16 %v489
    %v586 = vunpack.c.l.b16 %v490
    %v587 = vunpack.c.l.b16 %v491
    %v588 = vunpack.c.l.b16 %v492
    %v589 = vunpack.c.l.b16 %v493
    %v590 = vunpack.c.l.b16 %v494
    %v591 = vunpack.c.l.b16 %v495
    %v592 = vunpack.c.l.b16 %v496
    %v593 = vunpack.c.l.b16 %v497
    %v594 = vunpack.c.l.b16 %v498
    %v595 = vunpack.c.l.b16 %v499
    %v596 = vunpack.c.l.b16 %v500
    %v597 = vunpack.c.l.b16 %v501
    %v598 = vunpack.c.l.b16 %v502
    %v599 = vunpack.c.l.b16 %v503
    %v600 = vunpack.c.l.b16 %v504
    %v601 = vunpack.c.l.b16 %v505
    %v602 = vunpack.c.l.b16 %v506
    %v603 = vunpack.c.l.b16 %v507
    %v604 = vunpack.c.l.b16 %v508
    %v605 = vunpack.c.l.b16 %v509
    %v606 = vunpack.c.l.b16 %v510
    %v607 = vunpack.c.l.b16 %v511
    %v608 = vunpack.c.l.b16 %v512
    %v609 = vunpack.c.l.b16 %v513
    %v610 = vunpack.c.l.b16 %v514
    %v611 = vunpack.c.l.b16 %v515
    %v612 = vunpack.c.l.b16 %v516
    %v613 = vunpack.c.l.b16 %v517
    %v614 = vunpack.c.l.b16 %v518
    %v615 = vunpack.c.l.b16 %v519
    %v616 = vunpack.c.l.b16 %v520
    %v617 = vunpack.c.l.b16 %v521
    %v618 = vpack.c.b16 %v571, %v570
    %v619 = vpack.c.b16 %v573, %v572
    %v620 = vpack.c.b16 %v575, %v574
    %v621 = vpack.c.b16 %v577, %v576
    %v622 = vpack.c.b16 %v579, %v578
    %v623 = vpack.c.b16 %v581, %v580
    %v624 = vpack.c.b16 %v583, %v582
    %v625 = vpack.c.b16 %v585, %v584
    %v626 = vpack.c.b16 %v587, %v586
    %v627 = vpack.c.b16 %v589, %v588
    %v628 = vpack.c.b16 %v591, %v590
    %v629 = vpack.c.b16 %v593, %v592
    %v630 = vpack.c.b16 %v595, %v594
    %v631 = vpack.c.b16 %v597, %v596
    %v632 = vpack.c.b16 %v599, %v598
    %v633 = vpack.c.b16 %v601, %v600
    %v634 = vpack.c.b16 %v603, %v602
    %v635 = vpack.c.b16 %v605, %v604
    %v636 = vpack.c.b16 %v607, %v606
    %v637 = vpack.c.b16 %v609, %v608
    %v638 = vpack.c.b16 %v611, %v610
    %v639 = vpack.c.b16 %v613, %v612
    %v640 = vpack.c.b16 %v615, %v614
    %v641 = vpack.c.b16 %v617, %v616
    %666 = vmatpush.bf16.msra.mxu0 %v625
    %667 = vmatpush.bf16.msra.mxu0 %v624
    %668 = vmatpush.bf16.msra.mxu0 %v623
    %669 = vmatpush.bf16.msra.mxu0 %v622
    %670 = vmatpush.bf16.msra.mxu0 %v621
    %671 = vmatpush.bf16.msra.mxu0 %v620
    %672 = vmatpush.bf16.msra.mxu0 %v619
    %673 = vmatpush.bf16.msra.mxu0 %v618
    %674 = vmatmul.bf16.gmra.mxu0 %v464
    %v675 = vpop.f32.mrf.mxu0
    %v676 = vadd.f32 0.0, %v675
    %v677 = vpop.f32.mrf.mxu0
    %v678 = vadd.f32 0.0, %v677
    %679 = vmatmul.bf16.gmra.mxu0 %v467
    %v680 = vpop.f32.mrf.mxu0
    %v681 = vadd.f32 0.0, %v680
    %v682 = vpop.f32.mrf.mxu0
    %v683 = vadd.f32 0.0, %v682
    %684 = vmatmul.bf16.gmra.mxu0 %v470
    %v685 = vpop.f32.mrf.mxu0
    %v686 = vadd.f32 0.0, %v685
    %v687 = vpop.f32.mrf.mxu0
    %688 = vdwg.mxu0
    %689 = vmatpush.bf16.msra.mxu0 %v633
    %690 = vmatpush.bf16.msra.mxu0 %v632
    %691 = vmatpush.bf16.msra.mxu0 %v631
    %692 = vmatpush.bf16.msra.mxu0 %v630
    %693 = vmatpush.bf16.msra.mxu0 %v629
    %694 = vmatpush.bf16.msra.mxu0 %v628
    %695 = vmatpush.bf16.msra.mxu0 %v627
    %696 = vmatpush.bf16.msra.mxu0 %v626
    %697 = vmatmul.bf16.gmra.mxu0 %v465
    %v698 = vpop.f32.mrf.mxu0
    %v699 = vadd.f32 %v676, %v698
    %v700 = vpop.f32.mrf.mxu0
    %v701 = vadd.f32 %v678, %v700
    %702 = vmatmul.bf16.gmra.mxu0 %v468
    %v703 = vpop.f32.mrf.mxu0
    %v704 = vadd.f32 %v681, %v703
    %v705 = vpop.f32.mrf.mxu0
    %v706 = vadd.f32 %v683, %v705
    %707 = vmatmul.bf16.gmra.mxu0 %v471
    %v708 = vpop.f32.mrf.mxu0
    %v709 = vadd.f32 %v686, %v708
    %v710 = vpop.f32.mrf.mxu0
    %711 = vdwg.mxu0
    %712 = vmatpush.bf16.msra.mxu0 %v641
    %713 = vmatpush.bf16.msra.mxu0 %v640
    %714 = vmatpush.bf16.msra.mxu0 %v639
    %715 = vmatpush.bf16.msra.mxu0 %v638
    %716 = vmatpush.bf16.msra.mxu0 %v637
    %717 = vmatpush.bf16.msra.mxu0 %v636
    %718 = vmatpush.bf16.msra.mxu0 %v635
    %719 = vmatpush.bf16.msra.mxu0 %v634
    %720 = vmatmul.bf16.gmra.mxu0 %v466
    %v721 = vpop.f32.mrf.mxu0
    %v722 = vadd.f32 %v699, %v721
    %v723 = vpop.f32.mrf.mxu0
    %v724 = vadd.f32 %v701, %v723
    %725 = vmatmul.bf16.gmra.mxu0 %v469
    %v726 = vpop.f32.mrf.mxu0
    %v727 = vadd.f32 %v704, %v726
    %v728 = vpop.f32.mrf.mxu0
    %v729 = vadd.f32 %v706, %v728
    %730 = vmatmul.bf16.gmra.mxu0 %v472
    %v731 = vpop.f32.mrf.mxu0
    %v732 = vadd.f32 %v709, %v731
    %v733 = vpop.f32.mrf.mxu0
    %734 = vdwg.mxu0
    %s735 = scalar_lea.vmem %s4, 40
    %v736 = vld [vmem:[%s735] sm:$0xff]
    %v737 = vld [vmem:[%s735 + $0x8] sm:$0xff]
    %v738 = vld [vmem:[%s735 + $0x10] sm:$0xff]
    %v739 = vld [vmem:[%s735 + $0x18] sm:$0xff]
    %v740 = vld [vmem:[%s735 + $0x20] sm:$0xff]
    %742 = vset.pattern.permute.xlu0 0
    %743 = vperm.xlu0 %742, %v736
    %v744 = vpop.permute.xlu0 %743
    %747 = vset.pattern.permute.xlu0 0
    %748 = vperm.xlu0 %747, %v737
    %v749 = vpop.permute.xlu0 %748
    %752 = vset.pattern.permute.xlu0 0
    %753 = vperm.xlu0 %752, %v738
    %v754 = vpop.permute.xlu0 %753
    %757 = vset.pattern.permute.xlu0 0
    %758 = vperm.xlu0 %757, %v739
    %v759 = vpop.permute.xlu0 %758
    %762 = vset.pattern.permute.xlu0 0
    %763 = vperm.xlu0 %762, %v740
    %v764 = vpop.permute.xlu0 %763
    %v766 = vmul.f32 %v722, %v744
    %v767 = vmul.f32 %v724, %v749
    %v768 = vmul.f32 %v727, %v754
    %v769 = vmul.f32 %v729, %v759
    %v770 = vmul.f32 %v732, %v764
    %v771 = vadd.f32 %v766, %v767
    %v772 = vadd.f32 %v771, %v768
    %v773 = vadd.f32 %v772, %v769
    %v774 = vadd.f32 %v773, %v770
    %v775 = vrot.slane %v774, 4
    %v776 = vadd.f32 %v774, %v775
    %v777 = vrot.slane %v776, 2
    %v778 = vadd.f32 %v776, %v777
    %v779 = vrot.slane %v778, 1
    %v780 = vadd.f32 %v778, %v779
    %v781 = vmul.f32 %v766, %v766
    %v782 = vmul.f32 %v767, %v767
    %v783 = vmul.f32 %v768, %v768
    %v784 = vmul.f32 %v769, %v769
    %v785 = vmul.f32 %v770, %v770
    %v786 = vadd.f32 %v781, %v782
    %v787 = vadd.f32 %v786, %v783
    %v788 = vadd.f32 %v787, %v784
    %v789 = vadd.f32 %v788, %v785
    %v790 = vrot.slane %v789, 4
    %v791 = vadd.f32 %v789, %v790
    %v792 = vrot.slane %v791, 2
    %v793 = vadd.f32 %v791, %v792
    %v794 = vrot.slane %v793, 1
    %v795 = vadd.f32 %v793, %v794
    %v796 = vmul.f32 %v780, 0.125
    %v797 = vmul.f32 %v795, 0.125
    %v798 = vmul.f32 %v796, %v796
    %v799 = vsub.f32 %v797, %v798
    %v800 = vmax.f32 %v799, 0.0
    %s801 = scalar_lea.vmem %s2, 1
    %v802 = vld [vmem:[%s801] sm:$0x1]
    %v803 = vadd.f32 %v800, 1e-05
    %v804 = vrsqrt.pop %v803
    %v805 = vmul.f32 %v804, %v803
    %v806 = vmul.f32 %v805, %v804
    %v807 = vmul.f32 0.5, %v806
    %v808 = vsub.f32 1.5, %v807
    %v809 = vmul.f32 %v804, %v808
    %vm810 = vweird.f32 %v803
    %vm811 = vweird.f32 %v804
    %vm812 = vmor %vm810, %vm811
    %v813 = vsel %vm812, %v804, %v809
    %v814 = vmul.f32 %v802, %v813
    %s815 = scalar_lea.vmem %s3, 1
    %v816 = vld [vmem:[%s815] sm:$0x1]
    %v817 = vmul.f32 %v796, %v814
    %v818 = vsub.f32 %v816, %v817
    %v820 = vperm.slane %v814, 0
    %v822 = vmul.f32 %v722, %v820
    %v823 = vmul.f32 %v724, %v820
    %v824 = vmul.f32 %v727, %v820
    %v825 = vmul.f32 %v729, %v820
    %v826 = vmul.f32 %v732, %v820
    %v828 = vperm.slane %v818, 0
    %v830 = vadd.f32 %v822, %v828
    %v831 = vadd.f32 %v823, %v828
    %v832 = vadd.f32 %v824, %v828
    %v833 = vadd.f32 %v825, %v828
    %v834 = vadd.f32 %v826, %v828
    %v835 = vmax.f32 %v830, 0.0
    %v836 = vmax.f32 %v831, 0.0
    %v837 = vmax.f32 %v832, 0.0
    %v838 = vmax.f32 %v833, 0.0
    %v839 = vmax.f32 %v834, 0.0
    %v840 = vmul.f32 %v835, %v744
    %v841 = vmul.f32 %v836, %v749
    %v842 = vmul.f32 %v837, %v754
    %v843 = vmul.f32 %v838, %v759
    %v844 = vmul.f32 %v839, %v764
    %v845 = vrot.slane %v840, 2
    %v846 = vrot.slane %v841, 2
    %v847 = vrot.slane %v842, 2
    %v848 = vrot.slane %v843, 2
    %v849 = vrot.slane %v844, 2
    %v850 = vsel %vm458, %v848, %v849
    %v851 = vsel %vm458, %v847, %v848
    %v852 = vsel %vm458, %v846, %v847
    %v853 = vsel %vm458, %v845, %v846
    %v854 = vsel %vm458, %v849, %v845
    %v855 = vrot.slane %v840, 6
    %v856 = vrot.slane %v841, 6
    %v857 = vrot.slane %v842, 6
    %v858 = vrot.slane %v843, 6
    %v859 = vrot.slane %v844, 6
    %v860 = vsel %vm447, %v858, %v859
    %v861 = vsel %vm447, %v857, %v858
    %v862 = vsel %vm447, %v856, %v857
    %v863 = vsel %vm447, %v855, %v856
    %v864 = vsel %vm447, %v859, %v855
    %v865 = vpack.c.bf16 %v852, %v853
    %v866 = vpack.c.bf16 %v841, %v840
    %v867 = vpack.c.bf16 %v863, %v864
    %v868 = vpack.c.bf16 %v850, %v851
    %v869 = vpack.c.bf16 %v843, %v842
    %v870 = vpack.c.bf16 %v861, %v862
    %v871 = vpack.c.bf16 %v854, %v854
    %v872 = vpack.c.bf16 %v844, %v844
    %v873 = vpack.c.bf16 %v860, %v860
    %s874 = scalar_lea.vmem [#allocation2], 384
    %v875 = vld [vmem:[%s874] sm:$0xf]
    %v876 = vld [vmem:[%s874 + $0x4] sm:$0xf]
    %v877 = vld [vmem:[%s874 + $0x8] sm:$0xf]
    %v878 = vld [vmem:[%s874 + $0xc] sm:$0xf]
    %v879 = vld [vmem:[%s874 + $0x10] sm:$0xf]
    %v880 = vld [vmem:[%s874 + $0x14] sm:$0xf]
    %v881 = vld [vmem:[%s874 + $0x18] sm:$0xf]
    %v882 = vld [vmem:[%s874 + $0x1c] sm:$0xf]
    %v883 = vld [vmem:[%s874 + $0x20] sm:$0xf]
    %v884 = vld [vmem:[%s874 + $0x24] sm:$0xf]
    %v885 = vld [vmem:[%s874 + $0x28] sm:$0xf]
    %v886 = vld [vmem:[%s874 + $0x2c] sm:$0xf]
    %v887 = vld [vmem:[%s874 + $0x30] sm:$0xf]
    %v888 = vld [vmem:[%s874 + $0x34] sm:$0xf]
    %v889 = vld [vmem:[%s874 + $0x38] sm:$0xf]
    %v890 = vld [vmem:[%s874 + $0x3c] sm:$0xf]
    %v891 = vld [vmem:[%s874 + $0x40] sm:$0xf]
    %v892 = vld [vmem:[%s874 + $0x44] sm:$0xf]
    %v893 = vld [vmem:[%s874 + $0x48] sm:$0xf]
    %v894 = vld [vmem:[%s874 + $0x4c] sm:$0xf]
    %v895 = vld [vmem:[%s874 + $0x50] sm:$0xf]
    %v896 = vld [vmem:[%s874 + $0x54] sm:$0xf]
    %v897 = vld [vmem:[%s874 + $0x58] sm:$0xf]
    %v898 = vld [vmem:[%s874 + $0x5c] sm:$0xf]
    %v899 = vld [vmem:[%s874 + $0x60] sm:$0xf]
    %v900 = vld [vmem:[%s874 + $0x64] sm:$0xf]
    %v901 = vld [vmem:[%s874 + $0x68] sm:$0xf]
    %v902 = vld [vmem:[%s874 + $0x6c] sm:$0xf]
    %v903 = vld [vmem:[%s874 + $0x70] sm:$0xf]
    %v904 = vld [vmem:[%s874 + $0x74] sm:$0xf]
    %v905 = vld [vmem:[%s874 + $0x78] sm:$0xf]
    %v906 = vld [vmem:[%s874 + $0x7c] sm:$0xf]
    %v907 = vld [vmem:[%s874 + $0x80] sm:$0xf]
    %v908 = vld [vmem:[%s874 + $0x84] sm:$0xf]
    %v909 = vld [vmem:[%s874 + $0x88] sm:$0xf]
    %v910 = vld [vmem:[%s874 + $0x8c] sm:$0xf]
    %v911 = vld [vmem:[%s874 + $0x90] sm:$0xf]
    %v912 = vld [vmem:[%s874 + $0x94] sm:$0xf]
    %v913 = vld [vmem:[%s874 + $0x98] sm:$0xf]
    %v914 = vld [vmem:[%s874 + $0x9c] sm:$0xf]
    %v915 = vld [vmem:[%s874 + $0xa0] sm:$0xf]
    %v916 = vld [vmem:[%s874 + $0xa4] sm:$0xf]
    %v917 = vld [vmem:[%s874 + $0xa8] sm:$0xf]
    %v918 = vld [vmem:[%s874 + $0xac] sm:$0xf]
    %v919 = vld [vmem:[%s874 + $0xb0] sm:$0xf]
    %v920 = vld [vmem:[%s874 + $0xb4] sm:$0xf]
    %v921 = vld [vmem:[%s874 + $0xb8] sm:$0xf]
    %v922 = vld [vmem:[%s874 + $0xbc] sm:$0xf]
    %v971 = vunpack.c.l.b16 %v875
    %v972 = vunpack.c.l.b16 %v876
    %v973 = vunpack.c.l.b16 %v877
    %v974 = vunpack.c.l.b16 %v878
    %v975 = vunpack.c.l.b16 %v879
    %v976 = vunpack.c.l.b16 %v880
    %v977 = vunpack.c.l.b16 %v881
    %v978 = vunpack.c.l.b16 %v882
    %v979 = vunpack.c.l.b16 %v883
    %v980 = vunpack.c.l.b16 %v884
    %v981 = vunpack.c.l.b16 %v885
    %v982 = vunpack.c.l.b16 %v886
    %v983 = vunpack.c.l.b16 %v887
    %v984 = vunpack.c.l.b16 %v888
    %v985 = vunpack.c.l.b16 %v889
    %v986 = vunpack.c.l.b16 %v890
    %v987 = vunpack.c.l.b16 %v891
    %v988 = vunpack.c.l.b16 %v892
    %v989 = vunpack.c.l.b16 %v893
    %v990 = vunpack.c.l.b16 %v894
    %v991 = vunpack.c.l.b16 %v895
    %v992 = vunpack.c.l.b16 %v896
    %v993 = vunpack.c.l.b16 %v897
    %v994 = vunpack.c.l.b16 %v898
    %v995 = vunpack.c.l.b16 %v899
    %v996 = vunpack.c.l.b16 %v900
    %v997 = vunpack.c.l.b16 %v901
    %v998 = vunpack.c.l.b16 %v902
    %v999 = vunpack.c.l.b16 %v903
    %v1000 = vunpack.c.l.b16 %v904
    %v1001 = vunpack.c.l.b16 %v905
    %v1002 = vunpack.c.l.b16 %v906
    %v1003 = vunpack.c.l.b16 %v907
    %v1004 = vunpack.c.l.b16 %v908
    %v1005 = vunpack.c.l.b16 %v909
    %v1006 = vunpack.c.l.b16 %v910
    %v1007 = vunpack.c.l.b16 %v911
    %v1008 = vunpack.c.l.b16 %v912
    %v1009 = vunpack.c.l.b16 %v913
    %v1010 = vunpack.c.l.b16 %v914
    %v1011 = vunpack.c.l.b16 %v915
    %v1012 = vunpack.c.l.b16 %v916
    %v1013 = vunpack.c.l.b16 %v917
    %v1014 = vunpack.c.l.b16 %v918
    %v1015 = vunpack.c.l.b16 %v919
    %v1016 = vunpack.c.l.b16 %v920
    %v1017 = vunpack.c.l.b16 %v921
    %v1018 = vunpack.c.l.b16 %v922
    %v1019 = vpack.c.b16 %v972, %v971
    %v1020 = vpack.c.b16 %v974, %v973
    %v1021 = vpack.c.b16 %v976, %v975
    %v1022 = vpack.c.b16 %v978, %v977
    %v1023 = vpack.c.b16 %v980, %v979
    %v1024 = vpack.c.b16 %v982, %v981
    %v1025 = vpack.c.b16 %v984, %v983
    %v1026 = vpack.c.b16 %v986, %v985
    %v1027 = vpack.c.b16 %v988, %v987
    %v1028 = vpack.c.b16 %v990, %v989
    %v1029 = vpack.c.b16 %v992, %v991
    %v1030 = vpack.c.b16 %v994, %v993
    %v1031 = vpack.c.b16 %v996, %v995
    %v1032 = vpack.c.b16 %v998, %v997
    %v1033 = vpack.c.b16 %v1000, %v999
    %v1034 = vpack.c.b16 %v1002, %v1001
    %v1035 = vpack.c.b16 %v1004, %v1003
    %v1036 = vpack.c.b16 %v1006, %v1005
    %v1037 = vpack.c.b16 %v1008, %v1007
    %v1038 = vpack.c.b16 %v1010, %v1009
    %v1039 = vpack.c.b16 %v1012, %v1011
    %v1040 = vpack.c.b16 %v1014, %v1013
    %v1041 = vpack.c.b16 %v1016, %v1015
    %v1042 = vpack.c.b16 %v1018, %v1017
    %1067 = vmatpush.bf16.msra.mxu0 %v1026
    %1068 = vmatpush.bf16.msra.mxu0 %v1025
    %1069 = vmatpush.bf16.msra.mxu0 %v1024
    %1070 = vmatpush.bf16.msra.mxu0 %v1023
    %1071 = vmatpush.bf16.msra.mxu0 %v1022
    %1072 = vmatpush.bf16.msra.mxu0 %v1021
    %1073 = vmatpush.bf16.msra.mxu0 %v1020
    %1074 = vmatpush.bf16.msra.mxu0 %v1019
    %1075 = vmatmul.bf16.gmra.mxu0 %v865
    %v1076 = vpop.f32.mrf.mxu0
    %v1077 = vadd.f32 0.0, %v1076
    %v1078 = vpop.f32.mrf.mxu0
    %v1079 = vadd.f32 0.0, %v1078
    %1080 = vmatmul.bf16.gmra.mxu0 %v868
    %v1081 = vpop.f32.mrf.mxu0
    %v1082 = vadd.f32 0.0, %v1081
    %v1083 = vpop.f32.mrf.mxu0
    %v1084 = vadd.f32 0.0, %v1083
    %1085 = vmatmul.bf16.gmra.mxu0 %v871
    %v1086 = vpop.f32.mrf.mxu0
    %v1087 = vadd.f32 0.0, %v1086
    %v1088 = vpop.f32.mrf.mxu0
    %1089 = vdwg.mxu0
    %1090 = vmatpush.bf16.msra.mxu0 %v1034
    %1091 = vmatpush.bf16.msra.mxu0 %v1033
    %1092 = vmatpush.bf16.msra.mxu0 %v1032
    %1093 = vmatpush.bf16.msra.mxu0 %v1031
    %1094 = vmatpush.bf16.msra.mxu0 %v1030
    %1095 = vmatpush.bf16.msra.mxu0 %v1029
    %1096 = vmatpush.bf16.msra.mxu0 %v1028
    %1097 = vmatpush.bf16.msra.mxu0 %v1027
    %1098 = vmatmul.bf16.gmra.mxu0 %v866
    %v1099 = vpop.f32.mrf.mxu0
    %v1100 = vadd.f32 %v1077, %v1099
    %v1101 = vpop.f32.mrf.mxu0
    %v1102 = vadd.f32 %v1079, %v1101
    %1103 = vmatmul.bf16.gmra.mxu0 %v869
    %v1104 = vpop.f32.mrf.mxu0
    %v1105 = vadd.f32 %v1082, %v1104
    %v1106 = vpop.f32.mrf.mxu0
    %v1107 = vadd.f32 %v1084, %v1106
    %1108 = vmatmul.bf16.gmra.mxu0 %v872
    %v1109 = vpop.f32.mrf.mxu0
    %v1110 = vadd.f32 %v1087, %v1109
    %v1111 = vpop.f32.mrf.mxu0
    %1112 = vdwg.mxu0
    %1113 = vmatpush.bf16.msra.mxu0 %v1042
    %1114 = vmatpush.bf16.msra.mxu0 %v1041
    %1115 = vmatpush.bf16.msra.mxu0 %v1040
    %1116 = vmatpush.bf16.msra.mxu0 %v1039
    %1117 = vmatpush.bf16.msra.mxu0 %v1038
    %1118 = vmatpush.bf16.msra.mxu0 %v1037
    %1119 = vmatpush.bf16.msra.mxu0 %v1036
    %1120 = vmatpush.bf16.msra.mxu0 %v1035
    %1121 = vmatmul.bf16.gmra.mxu0 %v867
    %v1122 = vpop.f32.mrf.mxu0
    %v1123 = vadd.f32 %v1100, %v1122
    %v1124 = vpop.f32.mrf.mxu0
    %v1125 = vadd.f32 %v1102, %v1124
    %1126 = vmatmul.bf16.gmra.mxu0 %v870
    %v1127 = vpop.f32.mrf.mxu0
    %v1128 = vadd.f32 %v1105, %v1127
    %v1129 = vpop.f32.mrf.mxu0
    %v1130 = vadd.f32 %v1107, %v1129
    %1131 = vmatmul.bf16.gmra.mxu0 %v873
    %v1132 = vpop.f32.mrf.mxu0
    %v1133 = vadd.f32 %v1110, %v1132
    %v1134 = vpop.f32.mrf.mxu0
    %1135 = vdwg.mxu0
    %s1136 = scalar_lea.vmem %s4, 80
    %v1137 = vld [vmem:[%s1136] sm:$0xff]
    %v1138 = vld [vmem:[%s1136 + $0x8] sm:$0xff]
    %v1139 = vld [vmem:[%s1136 + $0x10] sm:$0xff]
    %v1140 = vld [vmem:[%s1136 + $0x18] sm:$0xff]
    %v1141 = vld [vmem:[%s1136 + $0x20] sm:$0xff]
    %1143 = vset.pattern.permute.xlu0 0
    %1144 = vperm.xlu0 %1143, %v1137
    %v1145 = vpop.permute.xlu0 %1144
    %1148 = vset.pattern.permute.xlu0 0
    %1149 = vperm.xlu0 %1148, %v1138
    %v1150 = vpop.permute.xlu0 %1149
    %1153 = vset.pattern.permute.xlu0 0
    %1154 = vperm.xlu0 %1153, %v1139
    %v1155 = vpop.permute.xlu0 %1154
    %1158 = vset.pattern.permute.xlu0 0
    %1159 = vperm.xlu0 %1158, %v1140
    %v1160 = vpop.permute.xlu0 %1159
    %1163 = vset.pattern.permute.xlu0 0
    %1164 = vperm.xlu0 %1163, %v1141
    %v1165 = vpop.permute.xlu0 %1164
    %v1167 = vmul.f32 %v1123, %v1145
    %v1168 = vmul.f32 %v1125, %v1150
    %v1169 = vmul.f32 %v1128, %v1155
    %v1170 = vmul.f32 %v1130, %v1160
    %v1171 = vmul.f32 %v1133, %v1165
    %v1172 = vadd.f32 %v1167, %v1168
    %v1173 = vadd.f32 %v1172, %v1169
    %v1174 = vadd.f32 %v1173, %v1170
    %v1175 = vadd.f32 %v1174, %v1171
    %v1176 = vrot.slane %v1175, 4
    %v1177 = vadd.f32 %v1175, %v1176
    %v1178 = vrot.slane %v1177, 2
    %v1179 = vadd.f32 %v1177, %v1178
    %v1180 = vrot.slane %v1179, 1
    %v1181 = vadd.f32 %v1179, %v1180
    %v1182 = vmul.f32 %v1167, %v1167
    %v1183 = vmul.f32 %v1168, %v1168
    %v1184 = vmul.f32 %v1169, %v1169
    %v1185 = vmul.f32 %v1170, %v1170
    %v1186 = vmul.f32 %v1171, %v1171
    %v1187 = vadd.f32 %v1182, %v1183
    %v1188 = vadd.f32 %v1187, %v1184
    %v1189 = vadd.f32 %v1188, %v1185
    %v1190 = vadd.f32 %v1189, %v1186
    %v1191 = vrot.slane %v1190, 4
    %v1192 = vadd.f32 %v1190, %v1191
    %v1193 = vrot.slane %v1192, 2
    %v1194 = vadd.f32 %v1192, %v1193
    %v1195 = vrot.slane %v1194, 1
    %v1196 = vadd.f32 %v1194, %v1195
    %v1197 = vmul.f32 %v1181, 0.0625
    %v1198 = vmul.f32 %v1196, 0.0625
    %v1199 = vmul.f32 %v1197, %v1197
    %v1200 = vsub.f32 %v1198, %v1199
    %v1201 = vmax.f32 %v1200, 0.0
    %s1202 = scalar_lea.vmem %s2, 2
    %v1203 = vld [vmem:[%s1202] sm:$0x1]
    %v1204 = vadd.f32 %v1201, 1e-05
    %v1205 = vrsqrt.pop %v1204
    %v1206 = vmul.f32 %v1205, %v1204
    %v1207 = vmul.f32 %v1206, %v1205
    %v1208 = vmul.f32 0.5, %v1207
    %v1209 = vsub.f32 1.5, %v1208
    %v1210 = vmul.f32 %v1205, %v1209
    %vm1211 = vweird.f32 %v1204
    %vm1212 = vweird.f32 %v1205
    %vm1213 = vmor %vm1211, %vm1212
    %v1214 = vsel %vm1213, %v1205, %v1210
    %v1215 = vmul.f32 %v1203, %v1214
    %s1216 = scalar_lea.vmem %s3, 2
    %v1217 = vld [vmem:[%s1216] sm:$0x1]
    %v1218 = vmul.f32 %v1197, %v1215
    %v1219 = vsub.f32 %v1217, %v1218
    %v1221 = vperm.slane %v1215, 0
    %v1223 = vmul.f32 %v1123, %v1221
    %v1224 = vmul.f32 %v1125, %v1221
    %v1225 = vmul.f32 %v1128, %v1221
    %v1226 = vmul.f32 %v1130, %v1221
    %v1227 = vmul.f32 %v1133, %v1221
    %v1229 = vperm.slane %v1219, 0
    %v1231 = vadd.f32 %v1223, %v1229
    %v1232 = vadd.f32 %v1224, %v1229
    %v1233 = vadd.f32 %v1225, %v1229
    %v1234 = vadd.f32 %v1226, %v1229
    %v1235 = vadd.f32 %v1227, %v1229
    %v1236 = vmax.f32 %v1231, 0.0
    %v1237 = vmax.f32 %v1232, 0.0
    %v1238 = vmax.f32 %v1233, 0.0
    %v1239 = vmax.f32 %v1234, 0.0
    %v1240 = vmax.f32 %v1235, 0.0
    %v1241 = vmul.f32 %v1236, %v1145
    %v1242 = vmul.f32 %v1237, %v1150
    %v1243 = vmul.f32 %v1238, %v1155
    %v1244 = vmul.f32 %v1239, %v1160
    %v1245 = vmul.f32 %v1240, %v1165
    %v1246 = vrot.slane %v1241, 1
    %v1247 = vrot.slane %v1242, 1
    %v1248 = vrot.slane %v1243, 1
    %v1249 = vrot.slane %v1244, 1
    %v1250 = vrot.slane %v1245, 1
    %v1251 = vsel %vm59, %v1249, %v1250
    %v1252 = vsel %vm59, %v1248, %v1249
    %v1253 = vsel %vm59, %v1247, %v1248
    %v1254 = vsel %vm59, %v1246, %v1247
    %v1255 = vsel %vm59, %v1250, %v1246
    %v1256 = vrot.slane %v1241, 7
    %v1257 = vrot.slane %v1242, 7
    %v1258 = vrot.slane %v1243, 7
    %v1259 = vrot.slane %v1244, 7
    %v1260 = vrot.slane %v1245, 7
    %v1261 = vsel %vm48, %v1259, %v1260
    %v1262 = vsel %vm48, %v1258, %v1259
    %v1263 = vsel %vm48, %v1257, %v1258
    %v1264 = vsel %vm48, %v1256, %v1257
    %v1265 = vsel %vm48, %v1260, %v1256
    %v1266 = vpack.c.bf16 %v1253, %v1254
    %v1267 = vpack.c.bf16 %v1242, %v1241
    %v1268 = vpack.c.bf16 %v1264, %v1265
    %v1269 = vpack.c.bf16 %v1251, %v1252
    %v1270 = vpack.c.bf16 %v1244, %v1243
    %v1271 = vpack.c.bf16 %v1262, %v1263
    %v1272 = vpack.c.bf16 %v1255, %v1255
    %v1273 = vpack.c.bf16 %v1245, %v1245
    %v1274 = vpack.c.bf16 %v1261, %v1261
    %s1275 = scalar_lea.vmem [#allocation2], 576
    %v1276 = vld [vmem:[%s1275] sm:$0xf]
    %v1277 = vld [vmem:[%s1275 + $0x4] sm:$0xf]
    %v1278 = vld [vmem:[%s1275 + $0x8] sm:$0xf]
    %v1279 = vld [vmem:[%s1275 + $0xc] sm:$0xf]
    %v1280 = vld [vmem:[%s1275 + $0x10] sm:$0xf]
    %v1281 = vld [vmem:[%s1275 + $0x14] sm:$0xf]
    %v1282 = vld [vmem:[%s1275 + $0x18] sm:$0xf]
    %v1283 = vld [vmem:[%s1275 + $0x1c] sm:$0xf]
    %v1284 = vld [vmem:[%s1275 + $0x20] sm:$0xf]
    %v1285 = vld [vmem:[%s1275 + $0x24] sm:$0xf]
    %v1286 = vld [vmem:[%s1275 + $0x28] sm:$0xf]
    %v1287 = vld [vmem:[%s1275 + $0x2c] sm:$0xf]
    %v1288 = vld [vmem:[%s1275 + $0x30] sm:$0xf]
    %v1289 = vld [vmem:[%s1275 + $0x34] sm:$0xf]
    %v1290 = vld [vmem:[%s1275 + $0x38] sm:$0xf]
    %v1291 = vld [vmem:[%s1275 + $0x3c] sm:$0xf]
    %v1292 = vld [vmem:[%s1275 + $0x40] sm:$0xf]
    %v1293 = vld [vmem:[%s1275 + $0x44] sm:$0xf]
    %v1294 = vld [vmem:[%s1275 + $0x48] sm:$0xf]
    %v1295 = vld [vmem:[%s1275 + $0x4c] sm:$0xf]
    %v1296 = vld [vmem:[%s1275 + $0x50] sm:$0xf]
    %v1297 = vld [vmem:[%s1275 + $0x54] sm:$0xf]
    %v1298 = vld [vmem:[%s1275 + $0x58] sm:$0xf]
    %v1299 = vld [vmem:[%s1275 + $0x5c] sm:$0xf]
    %v1300 = vld [vmem:[%s1275 + $0x60] sm:$0xf]
    %v1301 = vld [vmem:[%s1275 + $0x64] sm:$0xf]
    %v1302 = vld [vmem:[%s1275 + $0x68] sm:$0xf]
    %v1303 = vld [vmem:[%s1275 + $0x6c] sm:$0xf]
    %v1304 = vld [vmem:[%s1275 + $0x70] sm:$0xf]
    %v1305 = vld [vmem:[%s1275 + $0x74] sm:$0xf]
    %v1306 = vld [vmem:[%s1275 + $0x78] sm:$0xf]
    %v1307 = vld [vmem:[%s1275 + $0x7c] sm:$0xf]
    %v1308 = vld [vmem:[%s1275 + $0x80] sm:$0xf]
    %v1309 = vld [vmem:[%s1275 + $0x84] sm:$0xf]
    %v1310 = vld [vmem:[%s1275 + $0x88] sm:$0xf]
    %v1311 = vld [vmem:[%s1275 + $0x8c] sm:$0xf]
    %v1312 = vld [vmem:[%s1275 + $0x90] sm:$0xf]
    %v1313 = vld [vmem:[%s1275 + $0x94] sm:$0xf]
    %v1314 = vld [vmem:[%s1275 + $0x98] sm:$0xf]
    %v1315 = vld [vmem:[%s1275 + $0x9c] sm:$0xf]
    %v1316 = vld [vmem:[%s1275 + $0xa0] sm:$0xf]
    %v1317 = vld [vmem:[%s1275 + $0xa4] sm:$0xf]
    %v1318 = vld [vmem:[%s1275 + $0xa8] sm:$0xf]
    %v1319 = vld [vmem:[%s1275 + $0xac] sm:$0xf]
    %v1320 = vld [vmem:[%s1275 + $0xb0] sm:$0xf]
    %v1321 = vld [vmem:[%s1275 + $0xb4] sm:$0xf]
    %v1322 = vld [vmem:[%s1275 + $0xb8] sm:$0xf]
    %v1323 = vld [vmem:[%s1275 + $0xbc] sm:$0xf]
    %v1372 = vunpack.c.l.b16 %v1276
    %v1373 = vunpack.c.l.b16 %v1277
    %v1374 = vunpack.c.l.b16 %v1278
    %v1375 = vunpack.c.l.b16 %v1279
    %v1376 = vunpack.c.l.b16 %v1280
    %v1377 = vunpack.c.l.b16 %v1281
    %v1378 = vunpack.c.l.b16 %v1282
    %v1379 = vunpack.c.l.b16 %v1283
    %v1380 = vunpack.c.l.b16 %v1284
    %v1381 = vunpack.c.l.b16 %v1285
    %v1382 = vunpack.c.l.b16 %v1286
    %v1383 = vunpack.c.l.b16 %v1287
    %v1384 = vunpack.c.l.b16 %v1288
    %v1385 = vunpack.c.l.b16 %v1289
    %v1386 = vunpack.c.l.b16 %v1290
    %v1387 = vunpack.c.l.b16 %v1291
    %v1388 = vunpack.c.l.b16 %v1292
    %v1389 = vunpack.c.l.b16 %v1293
    %v1390 = vunpack.c.l.b16 %v1294
    %v1391 = vunpack.c.l.b16 %v1295
    %v1392 = vunpack.c.l.b16 %v1296
    %v1393 = vunpack.c.l.b16 %v1297
    %v1394 = vunpack.c.l.b16 %v1298
    %v1395 = vunpack.c.l.b16 %v1299
    %v1396 = vunpack.c.l.b16 %v1300
    %v1397 = vunpack.c.l.b16 %v1301
    %v1398 = vunpack.c.l.b16 %v1302
    %v1399 = vunpack.c.l.b16 %v1303
    %v1400 = vunpack.c.l.b16 %v1304
    %v1401 = vunpack.c.l.b16 %v1305
    %v1402 = vunpack.c.l.b16 %v1306
    %v1403 = vunpack.c.l.b16 %v1307
    %v1404 = vunpack.c.l.b16 %v1308
    %v1405 = vunpack.c.l.b16 %v1309
    %v1406 = vunpack.c.l.b16 %v1310
    %v1407 = vunpack.c.l.b16 %v1311
    %v1408 = vunpack.c.l.b16 %v1312
    %v1409 = vunpack.c.l.b16 %v1313
    %v1410 = vunpack.c.l.b16 %v1314
    %v1411 = vunpack.c.l.b16 %v1315
    %v1412 = vunpack.c.l.b16 %v1316
    %v1413 = vunpack.c.l.b16 %v1317
    %v1414 = vunpack.c.l.b16 %v1318
    %v1415 = vunpack.c.l.b16 %v1319
    %v1416 = vunpack.c.l.b16 %v1320
    %v1417 = vunpack.c.l.b16 %v1321
    %v1418 = vunpack.c.l.b16 %v1322
    %v1419 = vunpack.c.l.b16 %v1323
    %v1420 = vpack.c.b16 %v1373, %v1372
    %v1421 = vpack.c.b16 %v1375, %v1374
    %v1422 = vpack.c.b16 %v1377, %v1376
    %v1423 = vpack.c.b16 %v1379, %v1378
    %v1424 = vpack.c.b16 %v1381, %v1380
    %v1425 = vpack.c.b16 %v1383, %v1382
    %v1426 = vpack.c.b16 %v1385, %v1384
    %v1427 = vpack.c.b16 %v1387, %v1386
    %v1428 = vpack.c.b16 %v1389, %v1388
    %v1429 = vpack.c.b16 %v1391, %v1390
    %v1430 = vpack.c.b16 %v1393, %v1392
    %v1431 = vpack.c.b16 %v1395, %v1394
    %v1432 = vpack.c.b16 %v1397, %v1396
    %v1433 = vpack.c.b16 %v1399, %v1398
    %v1434 = vpack.c.b16 %v1401, %v1400
    %v1435 = vpack.c.b16 %v1403, %v1402
    %v1436 = vpack.c.b16 %v1405, %v1404
    %v1437 = vpack.c.b16 %v1407, %v1406
    %v1438 = vpack.c.b16 %v1409, %v1408
    %v1439 = vpack.c.b16 %v1411, %v1410
    %v1440 = vpack.c.b16 %v1413, %v1412
    %v1441 = vpack.c.b16 %v1415, %v1414
    %v1442 = vpack.c.b16 %v1417, %v1416
    %v1443 = vpack.c.b16 %v1419, %v1418
    %1468 = vmatpush.bf16.msra.mxu0 %v1427
    %1469 = vmatpush.bf16.msra.mxu0 %v1426
    %1470 = vmatpush.bf16.msra.mxu0 %v1425
    %1471 = vmatpush.bf16.msra.mxu0 %v1424
    %1472 = vmatpush.bf16.msra.mxu0 %v1423
    %1473 = vmatpush.bf16.msra.mxu0 %v1422
    %1474 = vmatpush.bf16.msra.mxu0 %v1421
    %1475 = vmatpush.bf16.msra.mxu0 %v1420
    %1476 = vmatmul.bf16.gmra.mxu0 %v1266
    %v1477 = vpop.f32.mrf.mxu0
    %v1478 = vadd.f32 0.0, %v1477
    %v1479 = vpop.f32.mrf.mxu0
    %v1480 = vadd.f32 0.0, %v1479
    %1481 = vmatmul.bf16.gmra.mxu0 %v1269
    %v1482 = vpop.f32.mrf.mxu0
    %v1483 = vadd.f32 0.0, %v1482
    %v1484 = vpop.f32.mrf.mxu0
    %v1485 = vadd.f32 0.0, %v1484
    %1486 = vmatmul.bf16.gmra.mxu0 %v1272
    %v1487 = vpop.f32.mrf.mxu0
    %v1488 = vadd.f32 0.0, %v1487
    %v1489 = vpop.f32.mrf.mxu0
    %1490 = vdwg.mxu0
    %1491 = vmatpush.bf16.msra.mxu0 %v1435
    %1492 = vmatpush.bf16.msra.mxu0 %v1434
    %1493 = vmatpush.bf16.msra.mxu0 %v1433
    %1494 = vmatpush.bf16.msra.mxu0 %v1432
    %1495 = vmatpush.bf16.msra.mxu0 %v1431
    %1496 = vmatpush.bf16.msra.mxu0 %v1430
    %1497 = vmatpush.bf16.msra.mxu0 %v1429
    %1498 = vmatpush.bf16.msra.mxu0 %v1428
    %1499 = vmatmul.bf16.gmra.mxu0 %v1267
    %v1500 = vpop.f32.mrf.mxu0
    %v1501 = vadd.f32 %v1478, %v1500
    %v1502 = vpop.f32.mrf.mxu0
    %v1503 = vadd.f32 %v1480, %v1502
    %1504 = vmatmul.bf16.gmra.mxu0 %v1270
    %v1505 = vpop.f32.mrf.mxu0
    %v1506 = vadd.f32 %v1483, %v1505
    %v1507 = vpop.f32.mrf.mxu0
    %v1508 = vadd.f32 %v1485, %v1507
    %1509 = vmatmul.bf16.gmra.mxu0 %v1273
    %v1510 = vpop.f32.mrf.mxu0
    %v1511 = vadd.f32 %v1488, %v1510
    %v1512 = vpop.f32.mrf.mxu0
    %1513 = vdwg.mxu0
    %1514 = vmatpush.bf16.msra.mxu0 %v1443
    %1515 = vmatpush.bf16.msra.mxu0 %v1442
    %1516 = vmatpush.bf16.msra.mxu0 %v1441
    %1517 = vmatpush.bf16.msra.mxu0 %v1440
    %1518 = vmatpush.bf16.msra.mxu0 %v1439
    %1519 = vmatpush.bf16.msra.mxu0 %v1438
    %1520 = vmatpush.bf16.msra.mxu0 %v1437
    %1521 = vmatpush.bf16.msra.mxu0 %v1436
    %1522 = vmatmul.bf16.gmra.mxu0 %v1268
    %v1523 = vpop.f32.mrf.mxu0
    %v1524 = vadd.f32 %v1501, %v1523
    %v1525 = vpop.f32.mrf.mxu0
    %v1526 = vadd.f32 %v1503, %v1525
    %1527 = vmatmul.bf16.gmra.mxu0 %v1271
    %v1528 = vpop.f32.mrf.mxu0
    %v1529 = vadd.f32 %v1506, %v1528
    %v1530 = vpop.f32.mrf.mxu0
    %v1531 = vadd.f32 %v1508, %v1530
    %1532 = vmatmul.bf16.gmra.mxu0 %v1274
    %v1533 = vpop.f32.mrf.mxu0
    %v1534 = vadd.f32 %v1511, %v1533
    %v1535 = vpop.f32.mrf.mxu0
    %1536 = vdwg.mxu0
    %s1537 = scalar_lea.vmem %s4, 120
    %v1538 = vld [vmem:[%s1537] sm:$0xff]
    %v1539 = vld [vmem:[%s1537 + $0x8] sm:$0xff]
    %v1540 = vld [vmem:[%s1537 + $0x10] sm:$0xff]
    %v1541 = vld [vmem:[%s1537 + $0x18] sm:$0xff]
    %v1542 = vld [vmem:[%s1537 + $0x20] sm:$0xff]
    %1544 = vset.pattern.permute.xlu0 0
    %1545 = vperm.xlu0 %1544, %v1538
    %v1546 = vpop.permute.xlu0 %1545
    %1549 = vset.pattern.permute.xlu0 0
    %1550 = vperm.xlu0 %1549, %v1539
    %v1551 = vpop.permute.xlu0 %1550
    %1554 = vset.pattern.permute.xlu0 0
    %1555 = vperm.xlu0 %1554, %v1540
    %v1556 = vpop.permute.xlu0 %1555
    %1559 = vset.pattern.permute.xlu0 0
    %1560 = vperm.xlu0 %1559, %v1541
    %v1561 = vpop.permute.xlu0 %1560
    %1564 = vset.pattern.permute.xlu0 0
    %1565 = vperm.xlu0 %1564, %v1542
    %v1566 = vpop.permute.xlu0 %1565
    %v1568 = vmul.f32 %v1524, %v1546
    %v1569 = vmul.f32 %v1526, %v1551
    %v1570 = vmul.f32 %v1529, %v1556
    %v1571 = vmul.f32 %v1531, %v1561
    %v1572 = vmul.f32 %v1534, %v1566
    %v1573 = vadd.f32 %v1568, %v1569
    %v1574 = vadd.f32 %v1573, %v1570
    %v1575 = vadd.f32 %v1574, %v1571
    %v1576 = vadd.f32 %v1575, %v1572
    %v1577 = vrot.slane %v1576, 4
    %v1578 = vadd.f32 %v1576, %v1577
    %v1579 = vrot.slane %v1578, 2
    %v1580 = vadd.f32 %v1578, %v1579
    %v1581 = vrot.slane %v1580, 1
    %v1582 = vadd.f32 %v1580, %v1581
    %v1583 = vmul.f32 %v1568, %v1568
    %v1584 = vmul.f32 %v1569, %v1569
    %v1585 = vmul.f32 %v1570, %v1570
    %v1586 = vmul.f32 %v1571, %v1571
    %v1587 = vmul.f32 %v1572, %v1572
    %v1588 = vadd.f32 %v1583, %v1584
    %v1589 = vadd.f32 %v1588, %v1585
    %v1590 = vadd.f32 %v1589, %v1586
    %v1591 = vadd.f32 %v1590, %v1587
    %v1592 = vrot.slane %v1591, 4
    %v1593 = vadd.f32 %v1591, %v1592
    %v1594 = vrot.slane %v1593, 2
    %v1595 = vadd.f32 %v1593, %v1594
    %v1596 = vrot.slane %v1595, 1
    %v1597 = vadd.f32 %v1595, %v1596
    %v1598 = vmul.f32 %v1582, 0.03125
    %v1599 = vmul.f32 %v1597, 0.03125
    %v1600 = vmul.f32 %v1598, %v1598
    %v1601 = vsub.f32 %v1599, %v1600
    %v1602 = vmax.f32 %v1601, 0.0
    %s1603 = scalar_lea.vmem %s2, 3
    %v1604 = vld [vmem:[%s1603] sm:$0x1]
    %v1605 = vadd.f32 %v1602, 1e-05
    %v1606 = vrsqrt.pop %v1605
    %v1607 = vmul.f32 %v1606, %v1605
    %v1608 = vmul.f32 %v1607, %v1606
    %v1609 = vmul.f32 0.5, %v1608
    %v1610 = vsub.f32 1.5, %v1609
    %v1611 = vmul.f32 %v1606, %v1610
    %vm1612 = vweird.f32 %v1605
    %vm1613 = vweird.f32 %v1606
    %vm1614 = vmor %vm1612, %vm1613
    %v1615 = vsel %vm1614, %v1606, %v1611
    %v1616 = vmul.f32 %v1604, %v1615
    %s1617 = scalar_lea.vmem %s3, 3
    %v1618 = vld [vmem:[%s1617] sm:$0x1]
    %v1619 = vmul.f32 %v1598, %v1616
    %v1620 = vsub.f32 %v1618, %v1619
    %v1622 = vperm.slane %v1616, 0
    %v1624 = vmul.f32 %v1524, %v1622
    %v1625 = vmul.f32 %v1526, %v1622
    %v1626 = vmul.f32 %v1529, %v1622
    %v1627 = vmul.f32 %v1531, %v1622
    %v1628 = vmul.f32 %v1534, %v1622
    %v1630 = vperm.slane %v1620, 0
    %v1632 = vadd.f32 %v1624, %v1630
    %v1633 = vadd.f32 %v1625, %v1630
    %v1634 = vadd.f32 %v1626, %v1630
    %v1635 = vadd.f32 %v1627, %v1630
    %v1636 = vadd.f32 %v1628, %v1630
    %v1637 = vmax.f32 %v1632, 0.0
    %v1638 = vmax.f32 %v1633, 0.0
    %v1639 = vmax.f32 %v1634, 0.0
    %v1640 = vmax.f32 %v1635, 0.0
    %v1641 = vmax.f32 %v1636, 0.0
    %v1642 = vmul.f32 %v1637, %v1546
    %v1643 = vmul.f32 %v1638, %v1551
    %v1644 = vmul.f32 %v1639, %v1556
    %v1645 = vmul.f32 %v1640, %v1561
    %v1646 = vmul.f32 %v1641, %v1566
    %1647 = vst [vmem:[%s5] sm:$0xff] %v1642
    %1648 = vst [vmem:[%s5 + $0x8] sm:$0xff] %v1643
    %1649 = vst [vmem:[%s5 + $0x10] sm:$0xff] %v1644
    %1650 = vst [vmem:[%s5 + $0x18] sm:$0xff] %v1645
    %1651 = vst [vmem:[%s5 + $0x20] sm:$0xff] %v1646
    // Predicated region
    $region26: #{forward.1} parent=1 // pred_check
      _
    $region27: #{forward.1} parent=1 // pred_check_branch
      %1653 = sbr.rel (0) target = $region29
    $region28: #{forward.1} parent=1 // pred_region
      _
    $region29: #{forward.1} parent=1 // pred_fallthru
      _
    // Predicated region
    $region30: #{forward.1} parent=1 // pred_check
      _
    $region31: #{forward.1} parent=1 // pred_check_branch
      %1655 = sbr.rel (0) target = $region33
    $region32: #{forward.1} parent=1 // pred_region
      _
    $region33: #{forward.1} parent=1 // pred_fallthru
      _
    %1656 = vsyncpa [#allocation3], 1

</llo_original>
